<compile_context>
chip_gen: v7x
topology: tpu7x:2x2x1
jax: 0.10.0
libtpu: 0.0.40
codegen_flags: <defaults>
</compile_context>

<pallas_src>
import functools

import jax
import jax.numpy as jnp
from jax.experimental import pallas as pl
from jax.experimental.pallas import tpu as pltpu


def _silu(x):
    # sigmoid = 1 / (1 + exp(-x)); exp and the approximate reciprocal both run on
    # the EUP slot (off the VALU).  approx=True adds ~1e-3 rel. error; use
    # approx=False if tighter parity with the PyTorch reference is required.
    return x * pl.reciprocal(1.0 + jnp.exp(-x), approx=True)


def _conv3x3(taps, w_ref, *, k_per_tap):
    """3x3 conv as MXU matmuls from 9 pre-sliced bf16 taps of shape (M, k_per_tap).

    * k_per_tap  < 128: concatenate along K -> ONE (M, 9K) @ (9K, N) dot (keeps K
      wide enough for the MXU at tiny channel counts).
    * k_per_tap >= 128: 9 accumulating per-tap dots -> no (M, 9K) im2col temporary
      is ever materialized (VMEM / store-slot saver at real channel counts).
    """
    if k_per_tap >= 128:
        acc = jnp.dot(taps[0], w_ref[0:k_per_tap, :],
                      preferred_element_type=jnp.float32)
        for t in range(1, 9):
            acc = acc + jnp.dot(taps[t],
                                w_ref[t * k_per_tap:(t + 1) * k_per_tap, :],
                                preferred_element_type=jnp.float32)
        return acc
    a = jnp.concatenate(taps, axis=-1)
    return jnp.dot(a, w_ref[...], preferred_element_type=jnp.float32)


# ------------------------------ Pallas kernel ------------------------------ #

def _residual_block_kernel(xq_ref, w1_ref, b1_ref, w2_ref, b2_ref,
                           wp_ref, bp_ref, o_ref, y1pad_ref,
                           *, stride, row_tile, h_out, w_out, cin, cout):
    """One fused (image, row-tile) step.

    xq_ref   : (s*s, hq+2, wq, Cin) bf16  space-to-depth split of the padded input
                                          (+1 quotient-row zero halo top & bottom)
    w1_ref   : (9*Cin, Cout)  bf16   conv1 taps, BN1 scale folded in
    b1_ref   : (1, Cout)      f32
    w2_ref   : (9*Cout, Cout) bf16   conv2 taps, BN2 scale folded in
    b2_ref   : (1, Cout)      f32
    wp_ref   : (Cin, Cout)    bf16   1x1 projection (BNp folded) or exact identity
    bp_ref   : (1, Cout)      f32
    o_ref    : (1, row_tile*w_out, Cout)    bf16  unpadded output block
    y1pad_ref: (row_tile+2, w_out+2, Cout)  bf16  scratch: conv1 rows + 1-px halo
    """
    s, rt = stride, row_tile
    r = pl.program_id(1)
    row0 = r * rt                        # first output row of this tile
    m1 = (rt + 2) * w_out                # conv1 rows incl. recomputed 1-row halo
    m2 = rt * w_out

    # ---- conv1 (3x3, stride s) + BN1 + SiLU for rows [row0-1, row0+rt] --------
    # Taps are contiguous bf16 slices of the space-to-depth input (no f32 round
    # trip, no im2col in HBM).  The extra +1 quotient-row pad keeps the halo rows
    # in-bounds; their results are masked to exact zeros below.
    def in_tap(kh, kw):
        plane = (kh % s) * s + (kw % s)
        rs = row0 + kh // s              # == (row0 - 1) + kh//s + 1 (top pad row)
        v = xq_ref[plane, pl.ds(rs, rt + 2), kw // s:kw // s + w_out, :]
        return v.reshape(m1, cin)

    y1 = _conv3x3([in_tap(kh, kw) for kh in range(3) for kw in range(3)],
                  w1_ref, k_per_tap=cin)                       # (m1, Cout) f32
    y1 = _silu(y1 + b1_ref[...]).reshape(rt + 2, w_out, cout)

    # conv2's zero padding on the conv1 output: rows outside [0, h_out) -> 0.
    g = jax.lax.broadcasted_iota(jnp.int32, (rt + 2, 1, 1), 0) + (row0 - 1)
    y1 = jnp.where((g >= 0) & (g < h_out), y1, 0.0)

    # ---- conv1 result stays in a bf16 VMEM scratch with a 1-pixel halo --------
    # Only the two width-halo columns need explicit zeroing (cheap ring, not a
    # full memset); the top/bottom halo rows were just written (masked) above.
    zc = jnp.zeros((rt + 2, 1, cout), jnp.bfloat16)
    y1pad_ref[:, 0:1, :] = zc
    y1pad_ref[:, w_out + 1:w_out + 2, :] = zc
    y1pad_ref[:, 1:w_out + 1, :] = y1.astype(jnp.bfloat16)

    # ---- conv2 (3x3, stride 1) + BN2 ------------------------------------------
    def y1_tap(kh, kw):
        return y1pad_ref[kh:kh + rt, kw:kw + w_out, :].reshape(m2, cout)

    out = _conv3x3([y1_tap(kh, kw) for kh in range(3) for kw in range(3)],
                   w2_ref, k_per_tap=cout) + b2_ref[...]       # (m2, Cout) f32

    # ---- identity / 1x1 projection residual -----------------------------------
    plane_c = (1 % s) * s + (1 % s)
    xid = xq_ref[plane_c, pl.ds(row0 + 1 // s + 1, rt), 1 // s:1 // s + w_out, :]
    ident = jnp.dot(xid.reshape(m2, cin), wp_ref[...],
                    preferred_element_type=jnp.float32) + bp_ref[...]

    # residual add + final SiLU; bf16 store, no f32 / lane-padding writeback.
    o_ref[0] = _silu(out + ident).astype(o_ref.dtype)


# -------------------------------- wrapper ----------------------------------- #

def _pick_row_tile(h_out, w_out, target=64):
    # Largest divisor of h_out <= target whose output block keeps the sublane
    # dim (rt * w_out) a multiple of 8 (Pallas (8,128) block rule).
    for rt in sorted((d for d in range(1, h_out + 1) if h_out % d == 0),
                     reverse=True):
        if rt <= target and (rt == h_out or (rt * w_out) % 8 == 0):
            return rt
    return h_out


def _vmem_limit_bytes(need_bytes):
    try:
        cap = int(pltpu.get_tpu_info().vmem_capacity_bytes)
    except Exception:                    # conservative fallback (v7x per-core)
        cap = 64 * 1024 * 1024
    return int(min(max(2 * need_bytes, 32 * 1024 * 1024), int(cap * 0.9)))


def residual_block_forward(x_nchw, params, stride=1, row_tile=None):
    n, cin, h, w = x_nchw.shape
    cout = int(params["cout"])
    s = stride
    h_out = (h - 1) // s + 1
    w_out = (w - 1) // s + 1
    hw = h_out * w_out

    if row_tile is None:
        row_tile = _pick_row_tile(h_out, w_out)
    rt = row_tile
    assert h_out % rt == 0 and (rt == h_out or (rt * w_out) % 8 == 0), (h_out, w_out, rt)

    # NCHW -> NHWC bf16, conv "same" padding (+ pad up to a multiple of the
    # stride, + one extra quotient row top & bottom so recomputed conv2-halo rows
    # stay in-bounds), then a space-to-depth split so every in-kernel tap is a
    # contiguous slice.  Layout plumbing only: no 9x im2col duplication.
    x = jnp.transpose(x_nchw, (0, 2, 3, 1)).astype(jnp.bfloat16)
    hq = -(-(h + 2) // s)
    wq = -(-(w + 2) // s)
    hq_pad = hq + 2
    xpad = jnp.pad(x, ((0, 0),
                       (1 + s, 1 + hq * s - (h + 2) + s),
                       (1, 1 + wq * s - (w + 2)),
                       (0, 0)))
    xq = xpad.reshape(n, hq_pad, s, wq, s, cin).transpose(0, 2, 4, 1, 3, 5)
    xq = xq.reshape(n * s * s, hq_pad, wq, cin)
    # TODO(synk): at tiny Cin/Cout (<<128) the channel lanes are mostly padding;
    #             packing (W, C) jointly into lanes would cut input DMA further
    #             (moot at production channel counts >= 128).

    kernel = functools.partial(_residual_block_kernel, stride=s, row_tile=rt,
                               h_out=h_out, w_out=w_out, cin=cin, cout=cout)

    # Explicit scoped-VMEM budget sized from the actual buffers (x2 for double
    # buffering) plus matmul temporaries, clamped to the chip's capacity.
    m1, m2 = (rt + 2) * w_out, rt * w_out
    k1 = cin if cin >= 128 else 9 * cin
    k2 = cout if cout >= 128 else 9 * cout
    xq_block_bytes = (xq.size // n) * 2
    w_bytes = (9 * cin * cout + 9 * cout * cout + cin * cout) * 2 + 3 * cout * 4
    out_block_bytes = m2 * cout * 2
    need = (2 * xq_block_bytes + 2 * w_bytes + 2 * out_block_bytes
            + (rt + 2) * (w_out + 2) * cout * 2          # y1pad scratch (bf16)
            + m1 * k1 * 2 + m2 * k2 * 2                  # tap / im2col temporaries
            + (m1 + 3 * m2) * cout * 4)                  # f32 accumulators

    out = pl.pallas_call(
        kernel,
        out_shape=jax.ShapeDtypeStruct((n, hw, cout), jnp.bfloat16),
        grid_spec=pltpu.PrefetchScalarGridSpec(
            num_scalar_prefetch=0,
            grid=(n, h_out // rt),
            in_specs=[
                # xq: resident across the row-tile axis (index only changes with b)
                pl.BlockSpec((s * s, hq_pad, wq, cin), lambda b, r: (b, 0, 0, 0)),
                pl.BlockSpec((9 * cin, cout), lambda b, r: (0, 0)),
                pl.BlockSpec((1, cout), lambda b, r: (0, 0)),
                pl.BlockSpec((9 * cout, cout), lambda b, r: (0, 0)),
                pl.BlockSpec((1, cout), lambda b, r: (0, 0)),
                pl.BlockSpec((cin, cout), lambda b, r: (0, 0)),
                pl.BlockSpec((1, cout), lambda b, r: (0, 0)),
            ],
            out_specs=pl.BlockSpec((1, rt * w_out, cout), lambda b, r: (b, r, 0)),
            scratch_shapes=[
                pltpu.VMEM((rt + 2, w_out + 2, cout), jnp.bfloat16),
            ],
        ),
        compiler_params=pltpu.CompilerParams(
            # batch AND row-tile axes feed megacore (v7x: both TCs even at N=1)
            dimension_semantics=("parallel", "parallel"),
            vmem_limit_bytes=_vmem_limit_bytes(need)),
    )(xq, params["w1"], params["b1"], params["w2"], params["b2"],
      params["wp"], params["bp"])

    # Kernel writes bf16 (half the HBM writeback, no lane padding); cast back to
    # f32 only for interface parity with the PyTorch module.
    out = out.reshape(n, h_out, w_out, cout)
    return jnp.transpose(out, (0, 3, 1, 2)).astype(jnp.float32)


# ----------------------------- parameter setup ------------------------------ #

def init_params(key, cin, cout, stride):
    """Folded / packed parameters for the Pallas kernel + raw params for the
    f32 reference.  BatchNorm is eval-mode: running stats folded at init."""
    use_projection = (stride != 1) or (cin != cout)
    if not use_projection:
        assert stride == 1 and cin == cout   # identity path requirement

    keys = jax.random.split(key, 15)
    eps = 1e-5

    def bn_fold(kg, kb, km, kv, c):
        gamma = 1.0 + 0.1 * jax.random.normal(kg, (c,), jnp.float32)
        beta = 0.1 * jax.random.normal(kb, (c,), jnp.float32)
        mean = 0.1 * jax.random.normal(km, (c,), jnp.float32)
        var = 1.0 + 0.1 * jnp.abs(jax.random.normal(kv, (c,), jnp.float32))
        scale = gamma / jnp.sqrt(var + eps)
        return scale, beta - mean * scale

    w1_oihw = 0.2 * jax.random.normal(keys[0], (cout, cin, 3, 3), jnp.float32)
    w2_oihw = 0.2 * jax.random.normal(keys[1], (cout, cout, 3, 3), jnp.float32)
    wp_oihw = 0.2 * jax.random.normal(keys[2], (cout, cin, 1, 1), jnp.float32)
    s1, b1 = bn_fold(keys[3], keys[4], keys[5], keys[6], cout)
    s2, b2 = bn_fold(keys[7], keys[8], keys[9], keys[10], cout)
    sp, bp = bn_fold(keys[11], keys[12], keys[13], keys[14], cout)

    def conv_mat(w_oihw, scale):
        # OIHW -> ((kh*3+kw)*Cin + i, o), BN scale folded into the weights.
        co, ci, kh, kw = w_oihw.shape
        m = jnp.transpose(w_oihw, (2, 3, 1, 0)).reshape(kh * kw * ci, co)
        return m * scale[None, :]

    if use_projection:
        wp_mat = wp_oihw[:, :, 0, 0].T * sp[None, :]          # (Cin, Cout)
        bp_vec = bp
    else:
        # Identity residual expressed as an exact 1x1 identity "projection"
        # (bf16 * 1.0 accumulated in f32 is exact).
        wp_mat = jnp.eye(cin, cout, dtype=jnp.float32)
        bp_vec = jnp.zeros((cout,), jnp.float32)

    kernel_params = dict(
        cout=cout,
        w1=conv_mat(w1_oihw, s1).astype(jnp.bfloat16),        # (9*Cin, Cout)
        b1=b1.reshape(1, cout),
        w2=conv_mat(w2_oihw, s2).astype(jnp.bfloat16),        # (9*Cout, Cout)
        b2=b2.reshape(1, cout),
        wp=wp_mat.astype(jnp.bfloat16),                       # (Cin, Cout)
        bp=bp_vec.reshape(1, cout),
    )
    torch_params = dict(w1=w1_oihw, w2=w2_oihw, wp=wp_oihw,
                        s1=s1, b1=b1, s2=s2, b2=b2, sp=sp, bp=bp)
    return kernel_params, torch_params, use_projection


# ---------------------------- pure-JAX reference ---------------------------- #

def reference_forward(x_nchw, tp, stride, use_projection):
    prec = jax.lax.Precision.HIGHEST

    def conv(x, w, s, pad):
        return jax.lax.conv_general_dilated(
            x, w, (s, s), [(pad, pad), (pad, pad)],
            dimension_numbers=("NCHW", "OIHW", "NCHW"), precision=prec)

    def bn(x, scale, bias):
        return x * scale.reshape(1, -1, 1, 1) + bias.reshape(1, -1, 1, 1)

    silu = lambda v: v * jax.nn.sigmoid(v)
    out = silu(bn(conv(x_nchw, tp["w1"], stride, 1), tp["s1"], tp["b1"]))
    out = bn(conv(out, tp["w2"], 1, 1), tp["s2"], tp["b2"])
    if use_projection:
        ident = bn(conv(x_nchw, tp["wp"], stride, 0), tp["sp"], tp["bp"])
    else:
        ident = x_nchw
    return silu(out + ident)


# ---------------------------------- main ------------------------------------ #

if __name__ == "__main__":
    def run_case(name, n, cin, cout, hw_size, stride, row_tile, key):
        kx, kp = jax.random.split(key)
        x = jax.random.normal(kx, (n, cin, hw_size, hw_size), jnp.float32)
        kparams, tparams, use_proj = init_params(kp, cin, cout, stride)
        out = jax.block_until_ready(
            residual_block_forward(x, kparams, stride=stride, row_tile=row_tile))
        ref = reference_forward(x, tparams, stride, use_proj)
        assert out.shape == ref.shape, (name, out.shape, ref.shape)
        err = float(jnp.max(jnp.abs(out - ref)))
        # bf16 activations/weights/output vs f32 reference -> bf16-level tolerance
        assert bool(jnp.allclose(out, ref, atol=5e-2, rtol=5e-2)), (
            f"{name}: mismatch vs reference, max abs err = {err}")
        return err

    key = jax.random.PRNGKey(0)
    k1, k2 = jax.random.split(key)
    run_case("projection (stride=2, 4->8 ch, 2 row tiles)", 2, 4, 8, 16, 2, 4, k1)
    run_case("identity   (stride=1, 8->8 ch, 2 row tiles)", 2, 8, 8, 16, 1, 8, k2)
    run_case("identity   (stride=1, 8->8 ch, auto tiling)", 2, 8, 8, 16, 1, None, k2)
    print("KERNEL_OK")
</pallas_src>

<mosaic_0001>
module attributes {stable_mosaic.version = 11 : i64} {
  func.func @_residual_block_kernel(%arg0: i32, %arg1: i32, %arg2: memref<4x11x9x4xbf16, #tpu.memory_space<vmem>>, %arg3: memref<36x8xbf16, #tpu.memory_space<vmem>>, %arg4: memref<1x8xf32, #tpu.memory_space<vmem>>, %arg5: memref<72x8xbf16, #tpu.memory_space<vmem>>, %arg6: memref<1x8xf32, #tpu.memory_space<vmem>>, %arg7: memref<4x8xbf16, #tpu.memory_space<vmem>>, %arg8: memref<1x8xf32, #tpu.memory_space<vmem>>, %arg9: memref<1x32x8xbf16, #tpu.memory_space<vmem>>, %arg10: memref<6x10x8xbf16, #tpu.memory_space<vmem>>) attributes {dimension_semantics = [#tpu.dimension_semantics<parallel>, #tpu.dimension_semantics<parallel>], iteration_bounds = array<i64: 2, 2>, scalar_prefetch = 0 : i64, scratch_operands = 1 : i64, tpu.core_type = #tpu.core_type<tc>, window_params = [{transform_indices = @transform_0, window_bounds = array<i64: 4, 11, 9, 4>}, {pipeline_mode = #tpu.pipeline_mode<synchronous>, transform_indices = @transform_1, window_bounds = array<i64: 36, 8>}, {pipeline_mode = #tpu.pipeline_mode<synchronous>, transform_indices = @transform_2, window_bounds = array<i64: 1, 8>}, {pipeline_mode = #tpu.pipeline_mode<synchronous>, transform_indices = @transform_3, window_bounds = array<i64: 72, 8>}, {pipeline_mode = #tpu.pipeline_mode<synchronous>, transform_indices = @transform_4, window_bounds = array<i64: 1, 8>}, {pipeline_mode = #tpu.pipeline_mode<synchronous>, transform_indices = @transform_5, window_bounds = array<i64: 4, 8>}, {pipeline_mode = #tpu.pipeline_mode<synchronous>, transform_indices = @transform_6, window_bounds = array<i64: 1, 8>}, {transform_indices = @transform_7, window_bounds = array<i64: 1, 32, 8>}]} {
    %c4_i32 = arith.constant 4 : i32
    %0 = arith.muli %arg1, %c4_i32 : i32
    %c0_i32 = arith.constant 0 : i32
    %1 = arith.addi %0, %c0_i32 : i32
    %c0 = arith.constant 0 : index
    %2 = arith.index_cast %1 : i32 to index
    %c0_0 = arith.constant 0 : index
    %c0_1 = arith.constant 0 : index
    %3 = vector.load %arg2[%c0, %2, %c0_0, %c0_1] : memref<4x11x9x4xbf16, #tpu.memory_space<vmem>>, vector<1x6x8x4xbf16>
    %4 = vector.shape_cast %3 : vector<1x6x8x4xbf16> to vector<6x8x4xbf16>
    %5 = vector.shape_cast %4 : vector<6x8x4xbf16> to vector<48x4xbf16>
    %c0_i32_2 = arith.constant 0 : i32
    %6 = arith.addi %0, %c0_i32_2 : i32
    %c1 = arith.constant 1 : index
    %7 = arith.index_cast %6 : i32 to index
    %c0_3 = arith.constant 0 : index
    %c0_4 = arith.constant 0 : index
    %8 = vector.load %arg2[%c1, %7, %c0_3, %c0_4] : memref<4x11x9x4xbf16, #tpu.memory_space<vmem>>, vector<1x6x8x4xbf16>
    %9 = vector.shape_cast %8 : vector<1x6x8x4xbf16> to vector<6x8x4xbf16>
    %10 = vector.shape_cast %9 : vector<6x8x4xbf16> to vector<48x4xbf16>
    %c0_i32_5 = arith.constant 0 : i32
    %11 = arith.addi %0, %c0_i32_5 : i32
    %c0_6 = arith.constant 0 : index
    %12 = arith.index_cast %11 : i32 to index
    %c1_7 = arith.constant 1 : index
    %c0_8 = arith.constant 0 : index
    %13 = vector.load %arg2[%c0_6, %12, %c1_7, %c0_8] : memref<4x11x9x4xbf16, #tpu.memory_space<vmem>>, vector<1x6x8x4xbf16>
    %14 = vector.shape_cast %13 : vector<1x6x8x4xbf16> to vector<6x8x4xbf16>
    %15 = vector.shape_cast %14 : vector<6x8x4xbf16> to vector<48x4xbf16>
    %c0_i32_9 = arith.constant 0 : i32
    %16 = arith.addi %0, %c0_i32_9 : i32
    %c2 = arith.constant 2 : index
    %17 = arith.index_cast %16 : i32 to index
    %c0_10 = arith.constant 0 : index
    %c0_11 = arith.constant 0 : index
    %18 = vector.load %arg2[%c2, %17, %c0_10, %c0_11] : memref<4x11x9x4xbf16, #tpu.memory_space<vmem>>, vector<1x6x8x4xbf16>
    %19 = vector.shape_cast %18 : vector<1x6x8x4xbf16> to vector<6x8x4xbf16>
    %20 = vector.shape_cast %19 : vector<6x8x4xbf16> to vector<48x4xbf16>
    %c0_i32_12 = arith.constant 0 : i32
    %21 = arith.addi %0, %c0_i32_12 : i32
    %c3 = arith.constant 3 : index
    %22 = arith.index_cast %21 : i32 to index
    %c0_13 = arith.constant 0 : index
    %c0_14 = arith.constant 0 : index
    %23 = vector.load %arg2[%c3, %22, %c0_13, %c0_14] : memref<4x11x9x4xbf16, #tpu.memory_space<vmem>>, vector<1x6x8x4xbf16>
    %24 = vector.shape_cast %23 : vector<1x6x8x4xbf16> to vector<6x8x4xbf16>
    %25 = vector.shape_cast %24 : vector<6x8x4xbf16> to vector<48x4xbf16>
    %c0_i32_15 = arith.constant 0 : i32
    %26 = arith.addi %0, %c0_i32_15 : i32
    %c2_16 = arith.constant 2 : index
    %27 = arith.index_cast %26 : i32 to index
    %c1_17 = arith.constant 1 : index
    %c0_18 = arith.constant 0 : index
    %28 = vector.load %arg2[%c2_16, %27, %c1_17, %c0_18] : memref<4x11x9x4xbf16, #tpu.memory_space<vmem>>, vector<1x6x8x4xbf16>
    %29 = vector.shape_cast %28 : vector<1x6x8x4xbf16> to vector<6x8x4xbf16>
    %30 = vector.shape_cast %29 : vector<6x8x4xbf16> to vector<48x4xbf16>
    %c1_i32 = arith.constant 1 : i32
    %31 = arith.addi %0, %c1_i32 : i32
    %c0_19 = arith.constant 0 : index
    %32 = arith.index_cast %31 : i32 to index
    %c0_20 = arith.constant 0 : index
    %c0_21 = arith.constant 0 : index
    %33 = vector.load %arg2[%c0_19, %32, %c0_20, %c0_21] : memref<4x11x9x4xbf16, #tpu.memory_space<vmem>>, vector<1x6x8x4xbf16>
    %34 = vector.shape_cast %33 : vector<1x6x8x4xbf16> to vector<6x8x4xbf16>
    %35 = vector.shape_cast %34 : vector<6x8x4xbf16> to vector<48x4xbf16>
    %c1_i32_22 = arith.constant 1 : i32
    %36 = arith.addi %0, %c1_i32_22 : i32
    %c1_23 = arith.constant 1 : index
    %37 = arith.index_cast %36 : i32 to index
    %c0_24 = arith.constant 0 : index
    %c0_25 = arith.constant 0 : index
    %38 = vector.load %arg2[%c1_23, %37, %c0_24, %c0_25] : memref<4x11x9x4xbf16, #tpu.memory_space<vmem>>, vector<1x6x8x4xbf16>
    %39 = vector.shape_cast %38 : vector<1x6x8x4xbf16> to vector<6x8x4xbf16>
    %40 = vector.shape_cast %39 : vector<6x8x4xbf16> to vector<48x4xbf16>
    %c1_i32_26 = arith.constant 1 : i32
    %41 = arith.addi %0, %c1_i32_26 : i32
    %c0_27 = arith.constant 0 : index
    %42 = arith.index_cast %41 : i32 to index
    %c1_28 = arith.constant 1 : index
    %c0_29 = arith.constant 0 : index
    %43 = vector.load %arg2[%c0_27, %42, %c1_28, %c0_29] : memref<4x11x9x4xbf16, #tpu.memory_space<vmem>>, vector<1x6x8x4xbf16>
    %44 = vector.shape_cast %43 : vector<1x6x8x4xbf16> to vector<6x8x4xbf16>
    %45 = vector.shape_cast %44 : vector<6x8x4xbf16> to vector<48x4xbf16>
    %46 = tpu.concatenate %5, %10, %15, %20, %25, %30, %35, %40, %45 in 1 : vector<48x4xbf16>, vector<48x4xbf16>, vector<48x4xbf16>, vector<48x4xbf16>, vector<48x4xbf16>, vector<48x4xbf16>, vector<48x4xbf16>, vector<48x4xbf16>, vector<48x4xbf16> -> vector<48x36xbf16>
    %c0_30 = arith.constant 0 : index
    %c0_31 = arith.constant 0 : index
    %47 = vector.load %arg3[%c0_30, %c0_31] : memref<36x8xbf16, #tpu.memory_space<vmem>>, vector<36x8xbf16>
    %cst = arith.constant dense<0.000000e+00> : vector<48x8xf32>
    %48 = tpu.matmul %46, %47, %cst {dimension_numbers = #tpu.dot_dimension_numbers<[1], [0], [0], [1], [0, 0, 1, 1], [], []>} : vector<48x36xbf16>, vector<36x8xbf16>, vector<48x8xf32> -> vector<48x8xf32>
    %c0_32 = arith.constant 0 : index
    %c0_33 = arith.constant 0 : index
    %49 = vector.load %arg4[%c0_32, %c0_33] : memref<1x8xf32, #tpu.memory_space<vmem>>, vector<1x8xf32>
    %50 = vector.broadcast %49 : vector<1x8xf32> to vector<48x8xf32>
    %51 = arith.addf %48, %50 : vector<48x8xf32>
    %cst_34 = arith.constant 0.000000e+00 : f32
    %52 = vector.broadcast %cst_34 : f32 to vector<48x8xf32>
    %53 = arith.subf %52, %51 : vector<48x8xf32>
    %54 = math.exp %53 : vector<48x8xf32>
    %cst_35 = arith.constant 1.000000e+00 : f32
    %55 = vector.broadcast %cst_35 : f32 to vector<48x8xf32>
    %56 = arith.addf %55, %54 : vector<48x8xf32>
    %57 = tpu.reciprocal %56 {approx = true} : vector<48x8xf32> -> vector<48x8xf32>
    %58 = arith.mulf %51, %57 : vector<48x8xf32>
    %59 = vector.shape_cast %58 : vector<48x8xf32> to vector<6x8x8xf32>
    %60 = tpu.iota {dimensions = array<i32: 0>} : vector<6x1x1xi32>
    %c1_i32_36 = arith.constant 1 : i32
    %61 = arith.subi %0, %c1_i32_36 : i32
    %62 = vector.broadcast %61 : i32 to vector<6x1x1xi32>
    %63 = arith.addi %60, %62 : vector<6x1x1xi32>
    %c0_i32_37 = arith.constant 0 : i32
    %64 = vector.broadcast %c0_i32_37 : i32 to vector<6x1x1xi32>
    %65 = arith.cmpi sge, %63, %64 : vector<6x1x1xi32>
    %c8_i32 = arith.constant 8 : i32
    %66 = vector.broadcast %c8_i32 : i32 to vector<6x1x1xi32>
    %67 = arith.cmpi slt, %63, %66 : vector<6x1x1xi32>
    %68 = arith.andi %65, %67 : vector<6x1x1xi1>
    %cst_38 = arith.constant 0.000000e+00 : f32
    %69 = vector.shape_cast %68 : vector<6x1x1xi1> to vector<6x1x1xi1>
    %70 = vector.broadcast %69 : vector<6x1x1xi1> to vector<6x8x8xi1>
    %71 = vector.broadcast %cst_38 : f32 to vector<6x8x8xf32>
    %72 = arith.select %70, %59, %71 : vector<6x8x8xi1>, vector<6x8x8xf32>
    %cst_39 = arith.constant 0.000000e+00 : bf16
    %73 = vector.broadcast %cst_39 : bf16 to vector<6x1x8xbf16>
    %c0_40 = arith.constant 0 : index
    %c0_41 = arith.constant 0 : index
    %c0_42 = arith.constant 0 : index
    %74 = vector.load %arg10[%c0_40, %c0_41, %c0_42] : memref<6x10x8xbf16, #tpu.memory_space<vmem>>, vector<6x1x8xbf16>
    tpu.vector_store %arg10[%c0_40, %c0_41, %c0_42], %73 {strides = array<i32>} : memref<6x10x8xbf16, #tpu.memory_space<vmem>>, vector<6x1x8xbf16>,
    %c0_43 = arith.constant 0 : index
    %c9 = arith.constant 9 : index
    %c0_44 = arith.constant 0 : index
    %75 = vector.load %arg10[%c0_43, %c9, %c0_44] : memref<6x10x8xbf16, #tpu.memory_space<vmem>>, vector<6x1x8xbf16>
    tpu.vector_store %arg10[%c0_43, %c9, %c0_44], %73 {strides = array<i32>} : memref<6x10x8xbf16, #tpu.memory_space<vmem>>, vector<6x1x8xbf16>,
    %76 = arith.truncf %72 : vector<6x8x8xf32> to vector<6x8x8xbf16>
    %c0_45 = arith.constant 0 : index
    %c1_46 = arith.constant 1 : index
    %c0_47 = arith.constant 0 : index
    %77 = vector.load %arg10[%c0_45, %c1_46, %c0_47] : memref<6x10x8xbf16, #tpu.memory_space<vmem>>, vector<6x8x8xbf16>
    tpu.vector_store %arg10[%c0_45, %c1_46, %c0_47], %76 {strides = array<i32>} : memref<6x10x8xbf16, #tpu.memory_space<vmem>>, vector<6x8x8xbf16>,
    %c0_48 = arith.constant 0 : index
    %c0_49 = arith.constant 0 : index
    %c0_50 = arith.constant 0 : index
    %78 = vector.load %arg10[%c0_48, %c0_49, %c0_50] : memref<6x10x8xbf16, #tpu.memory_space<vmem>>, vector<4x8x8xbf16>
    %79 = vector.shape_cast %78 : vector<4x8x8xbf16> to vector<32x8xbf16>
    %c0_51 = arith.constant 0 : index
    %c1_52 = arith.constant 1 : index
    %c0_53 = arith.constant 0 : index
    %80 = vector.load %arg10[%c0_51, %c1_52, %c0_53] : memref<6x10x8xbf16, #tpu.memory_space<vmem>>, vector<4x8x8xbf16>
    %81 = vector.shape_cast %80 : vector<4x8x8xbf16> to vector<32x8xbf16>
    %c0_54 = arith.constant 0 : index
    %c2_55 = arith.constant 2 : index
    %c0_56 = arith.constant 0 : index
    %82 = vector.load %arg10[%c0_54, %c2_55, %c0_56] : memref<6x10x8xbf16, #tpu.memory_space<vmem>>, vector<4x8x8xbf16>
    %83 = vector.shape_cast %82 : vector<4x8x8xbf16> to vector<32x8xbf16>
    %c1_57 = arith.constant 1 : index
    %c0_58 = arith.constant 0 : index
    %c0_59 = arith.constant 0 : index
    %84 = vector.load %arg10[%c1_57, %c0_58, %c0_59] : memref<6x10x8xbf16, #tpu.memory_space<vmem>>, vector<4x8x8xbf16>
    %85 = vector.shape_cast %84 : vector<4x8x8xbf16> to vector<32x8xbf16>
    %c1_60 = arith.constant 1 : index
    %c1_61 = arith.constant 1 : index
    %c0_62 = arith.constant 0 : index
    %86 = vector.load %arg10[%c1_60, %c1_61, %c0_62] : memref<6x10x8xbf16, #tpu.memory_space<vmem>>, vector<4x8x8xbf16>
    %87 = vector.shape_cast %86 : vector<4x8x8xbf16> to vector<32x8xbf16>
    %c1_63 = arith.constant 1 : index
    %c2_64 = arith.constant 2 : index
    %c0_65 = arith.constant 0 : index
    %88 = vector.load %arg10[%c1_63, %c2_64, %c0_65] : memref<6x10x8xbf16, #tpu.memory_space<vmem>>, vector<4x8x8xbf16>
    %89 = vector.shape_cast %88 : vector<4x8x8xbf16> to vector<32x8xbf16>
    %c2_66 = arith.constant 2 : index
    %c0_67 = arith.constant 0 : index
    %c0_68 = arith.constant 0 : index
    %90 = vector.load %arg10[%c2_66, %c0_67, %c0_68] : memref<6x10x8xbf16, #tpu.memory_space<vmem>>, vector<4x8x8xbf16>
    %91 = vector.shape_cast %90 : vector<4x8x8xbf16> to vector<32x8xbf16>
    %c2_69 = arith.constant 2 : index
    %c1_70 = arith.constant 1 : index
    %c0_71 = arith.constant 0 : index
    %92 = vector.load %arg10[%c2_69, %c1_70, %c0_71] : memref<6x10x8xbf16, #tpu.memory_space<vmem>>, vector<4x8x8xbf16>
    %93 = vector.shape_cast %92 : vector<4x8x8xbf16> to vector<32x8xbf16>
    %c2_72 = arith.constant 2 : index
    %c2_73 = arith.constant 2 : index
    %c0_74 = arith.constant 0 : index
    %94 = vector.load %arg10[%c2_72, %c2_73, %c0_74] : memref<6x10x8xbf16, #tpu.memory_space<vmem>>, vector<4x8x8xbf16>
    %95 = vector.shape_cast %94 : vector<4x8x8xbf16> to vector<32x8xbf16>
    %96 = tpu.concatenate %79, %81, %83, %85, %87, %89, %91, %93, %95 in 1 : vector<32x8xbf16>, vector<32x8xbf16>, vector<32x8xbf16>, vector<32x8xbf16>, vector<32x8xbf16>, vector<32x8xbf16>, vector<32x8xbf16>, vector<32x8xbf16>, vector<32x8xbf16> -> vector<32x72xbf16>
    %c0_75 = arith.constant 0 : index
    %c0_76 = arith.constant 0 : index
    %97 = vector.load %arg5[%c0_75, %c0_76] : memref<72x8xbf16, #tpu.memory_space<vmem>>, vector<72x8xbf16>
    %cst_77 = arith.constant dense<0.000000e+00> : vector<32x8xf32>
    %98 = tpu.matmul %96, %97, %cst_77 {dimension_numbers = #tpu.dot_dimension_numbers<[1], [0], [0], [1], [0, 0, 1, 1], [], []>} : vector<32x72xbf16>, vector<72x8xbf16>, vector<32x8xf32> -> vector<32x8xf32>
    %c0_78 = arith.constant 0 : index
    %c0_79 = arith.constant 0 : index
    %99 = vector.load %arg6[%c0_78, %c0_79] : memref<1x8xf32, #tpu.memory_space<vmem>>, vector<1x8xf32>
    %100 = vector.broadcast %99 : vector<1x8xf32> to vector<32x8xf32>
    %101 = arith.addf %98, %100 : vector<32x8xf32>
    %c0_i32_80 = arith.constant 0 : i32
    %102 = arith.addi %0, %c0_i32_80 : i32
    %c1_i32_81 = arith.constant 1 : i32
    %103 = arith.addi %102, %c1_i32_81 : i32
    %c3_82 = arith.constant 3 : index
    %104 = arith.index_cast %103 : i32 to index
    %c0_83 = arith.constant 0 : index
    %c0_84 = arith.constant 0 : index
    %105 = vector.load %arg2[%c3_82, %104, %c0_83, %c0_84] : memref<4x11x9x4xbf16, #tpu.memory_space<vmem>>, vector<1x4x8x4xbf16>
    %106 = vector.shape_cast %105 : vector<1x4x8x4xbf16> to vector<4x8x4xbf16>
    %107 = vector.shape_cast %106 : vector<4x8x4xbf16> to vector<32x4xbf16>
    %c0_85 = arith.constant 0 : index
    %c0_86 = arith.constant 0 : index
    %108 = vector.load %arg7[%c0_85, %c0_86] : memref<4x8xbf16, #tpu.memory_space<vmem>>, vector<4x8xbf16>
    %cst_87 = arith.constant dense<0.000000e+00> : vector<32x8xf32>
    %109 = tpu.matmul %107, %108, %cst_87 {dimension_numbers = #tpu.dot_dimension_numbers<[1], [0], [0], [1], [0, 0, 1, 1], [], []>} : vector<32x4xbf16>, vector<4x8xbf16>, vector<32x8xf32> -> vector<32x8xf32>
    %c0_88 = arith.constant 0 : index
    %c0_89 = arith.constant 0 : index
    %110 = vector.load %arg8[%c0_88, %c0_89] : memref<1x8xf32, #tpu.memory_space<vmem>>, vector<1x8xf32>
    %111 = vector.broadcast %110 : vector<1x8xf32> to vector<32x8xf32>
    %112 = arith.addf %109, %111 : vector<32x8xf32>
    %113 = arith.addf %101, %112 : vector<32x8xf32>
    %cst_90 = arith.constant 0.000000e+00 : f32
    %114 = vector.broadcast %cst_90 : f32 to vector<32x8xf32>
    %115 = arith.subf %114, %113 : vector<32x8xf32>
    %116 = math.exp %115 : vector<32x8xf32>
    %cst_91 = arith.constant 1.000000e+00 : f32
    %117 = vector.broadcast %cst_91 : f32 to vector<32x8xf32>
    %118 = arith.addf %117, %116 : vector<32x8xf32>
    %119 = tpu.reciprocal %118 {approx = true} : vector<32x8xf32> -> vector<32x8xf32>
    %120 = arith.mulf %113, %119 : vector<32x8xf32>
    %121 = arith.truncf %120 : vector<32x8xf32> to vector<32x8xbf16>
    %c0_92 = arith.constant 0 : index
    %c0_93 = arith.constant 0 : index
    %c0_94 = arith.constant 0 : index
    %122 = vector.load %arg9[%c0_92, %c0_93, %c0_94] : memref<1x32x8xbf16, #tpu.memory_space<vmem>>, vector<1x32x8xbf16>
    %123 = vector.shape_cast %122 : vector<1x32x8xbf16> to vector<32x8xbf16>
    %124 = vector.shape_cast %121 : vector<32x8xbf16> to vector<1x32x8xbf16>
    tpu.vector_store %arg9[%c0_92, %c0_93, %c0_94], %124 {strides = array<i32>} : memref<1x32x8xbf16, #tpu.memory_space<vmem>>, vector<1x32x8xbf16>,
    return
  }
  func.func @transform_0(%arg0: i32, %arg1: i32) -> (i32, i32, i32, i32) {
    %c0_i32 = arith.constant 0 : i32
    %c0_i32_0 = arith.constant 0 : i32
    %c0_i32_1 = arith.constant 0 : i32
    %c0_i32_2 = arith.constant 0 : i32
    return %arg0, %c0_i32, %c0_i32_0, %c0_i32_1 : i32, i32, i32, i32
  }
  func.func @transform_1(%arg0: i32, %arg1: i32) -> (i32, i32) {
    %c0_i32 = arith.constant 0 : i32
    %c0_i32_0 = arith.constant 0 : i32
    %c0_i32_1 = arith.constant 0 : i32
    return %c0_i32, %c0_i32_0 : i32, i32
  }
  func.func @transform_2(%arg0: i32, %arg1: i32) -> (i32, i32) {
    %c0_i32 = arith.constant 0 : i32
    %c0_i32_0 = arith.constant 0 : i32
    %c0_i32_1 = arith.constant 0 : i32
    return %c0_i32, %c0_i32_0 : i32, i32
  }
  func.func @transform_3(%arg0: i32, %arg1: i32) -> (i32, i32) {
    %c0_i32 = arith.constant 0 : i32
    %c0_i32_0 = arith.constant 0 : i32
    %c0_i32_1 = arith.constant 0 : i32
    return %c0_i32, %c0_i32_0 : i32, i32
  }
  func.func @transform_4(%arg0: i32, %arg1: i32) -> (i32, i32) {
    %c0_i32 = arith.constant 0 : i32
    %c0_i32_0 = arith.constant 0 : i32
    %c0_i32_1 = arith.constant 0 : i32
    return %c0_i32, %c0_i32_0 : i32, i32
  }
  func.func @transform_5(%arg0: i32, %arg1: i32) -> (i32, i32) {
    %c0_i32 = arith.constant 0 : i32
    %c0_i32_0 = arith.constant 0 : i32
    %c0_i32_1 = arith.constant 0 : i32
    return %c0_i32, %c0_i32_0 : i32, i32
  }
  func.func @transform_6(%arg0: i32, %arg1: i32) -> (i32, i32) {
    %c0_i32 = arith.constant 0 : i32
    %c0_i32_0 = arith.constant 0 : i32
    %c0_i32_1 = arith.constant 0 : i32
    return %c0_i32, %c0_i32_0 : i32, i32
  }
  func.func @transform_7(%arg0: i32, %arg1: i32) -> (i32, i32, i32) {
    %c0_i32 = arith.constant 0 : i32
    %c0_i32_0 = arith.constant 0 : i32
    return %arg0, %arg1, %c0_i32 : i32, i32, i32
  }
}

</mosaic_0001>

<llo_original>
// kernel: tpu_custom_call.1
$region0: #{tpu_custom_call.1}
  #allocation0 [shape = 'u32[]', space=smem, size = 0x4, offset = 0x4, fixed_abs, tag = 'smem constant byte address 0x4 - core index']
  #allocation1 [shape = 'u32[144,128]{1,0:T(1,128)}', space=vmem, size = 0x12000, scoped, tag = 'internal scratch']
  #allocation2 [shape = 'bf16[6,10,8]{2,1,0:T(8,128)(2,1)}', space=vmem, size = 0x6000, scoped, tag = 'scratch operand']
  %s0 = inlined_call_operand.vmem [shape: bf16[8,11,9,4], index: 0, kind: input, shape index: {}]
  %s1 = inlined_call_operand.vmem [shape: bf16[36,8], index: 1, kind: input, shape index: {}]
  %s2 = inlined_call_operand.vmem [shape: f32[1,8], index: 2, kind: input, shape index: {}]
  %s3 = inlined_call_operand.vmem [shape: bf16[72,8], index: 3, kind: input, shape index: {}]
  %s4 = inlined_call_operand.vmem [shape: f32[1,8], index: 4, kind: input, shape index: {}]
  %s5 = inlined_call_operand.vmem [shape: bf16[4,8], index: 5, kind: input, shape index: {}]
  %s6 = inlined_call_operand.vmem [shape: f32[1,8], index: 6, kind: input, shape index: {}]
  %s7 = inlined_call_operand.vmem [shape: bf16[2,64,8], index: 7, kind: output, shape index: {}]
  %s8 = sld [smem:[#allocation0]]
  $region61: #{tpu_custom_call.1} parent=0
    _
  %s10 = ssub.s32 1, %s8
  %s11 = scalar_select 0, %s10, %s8
  loop: start=0, step=1, limit=6
  $region2: #{tpu_custom_call.1} parent=0 // loop_pre_header
    _
  $region3: #{tpu_custom_call.1} parent=0 // loop_header
    %s13 = sphi 0, %s17
    %p14 = scmp.ge.s32.totalorder %s13, 6
    %s20 = sphi 0, %s32
    %s21 = sphi 0, %s28
    %s22 = sphi 0, %s20
    %s23 = sphi 0, %s21
    %s24 = sphi 0, %s22
    %s25 = sphi 0, %s23
    %s35 = sphi 0, %s37
    %s38 = sphi 0, %s35
    %s39 = sphi 0, %s38
    %s55 = sphi 0, %s39
    %s59 = sphi 0, %s59
    %s61 = sphi 0, %s59
    %s62 = sphi 0, %s61
    %s76 = sphi 0, %s62
    %s80 = sphi 0, %s80
    %s82 = sphi 0, %s80
    %s83 = sphi 0, %s82
    %s97 = sphi 0, %s83
    %s101 = sphi 0, %s101
    %s103 = sphi 0, %s101
    %s104 = sphi 0, %s103
    %s118 = sphi 0, %s104
    %s122 = sphi 0, %s122
    %s124 = sphi 0, %s122
    %s125 = sphi 0, %s124
    %s139 = sphi 0, %s125
    %s143 = sphi 0, %s143
    %s145 = sphi 0, %s143
    %s146 = sphi 0, %s145
    %s160 = sphi 0, %s146
    %s164 = sphi 0, %s164
    %s166 = sphi 0, %s164
    %s167 = sphi 0, %s166
    %s181 = sphi 0, %s167
    %s189 = sphi 0, %s191
    %s192 = sphi 0, %s189
    %s193 = sphi 0, %s192
    %s209 = sphi 0, %s193
  $region4: #{tpu_custom_call.1} parent=0 // loop_header_branch
    %16 = sbr.rel (%p14) target = $region8
  $region5: #{tpu_custom_call.1} parent=0 // loop_body
    %s18 = ssub.s32 %s13, 1
    %s19 = ssub.s32 %s13, 2
    %s26 = sadd.s32 1, %s21
    %p27 = scmp.ge.s32.totalorder %s26, 2
    %s28 = scalar_select %p27, 0, %s26
    %s29 = sadd.s32 1, %s20
    %s30 = scalar_select %p27, %s29, %s20
    %p31 = scmp.ge.s32.totalorder %s30, 2
    %s32 = scalar_select %p31, 0, %s30
    %s33 = ssub.s32 %s20, %s32
    %p34 = scmp.eq.s32.totalorder %s33, 0
    %s36 = sadd.s32 %s35, 1
    %s37 = scalar_select %p34, %s35, %s36
    %p40 = pneg %p34
    %p41 = scmp.eq.s32.totalorder %s13, 3
    %p42 = por %p40, %p41
    %p43 = scmp.ne.s32.totalorder %s35, %s38
    %p44 = scmp.eq.s32.totalorder %s13, 0
    %p45 = por %p43, %p44
    %p46 = scmp.ne.s32.totalorder %s35, %s38
    %p47 = scmp.eq.s32.totalorder %s18, 3
    %p48 = por %p46, %p47
    %p49 = scmp.ne.s32.totalorder %s38, %s39
    %p50 = scmp.eq.s32.totalorder %s18, 0
    %p51 = por %p49, %p50
    %p52 = scmp.ne.s32.totalorder %s38, %s39
    %p53 = scmp.eq.s32.totalorder %s19, 3
    %p54 = por %p52, %p53
    %p56 = scmp.ne.s32.totalorder %s39, %s55
    %p57 = scmp.eq.s32.totalorder %s19, 0
    %p58 = por %p56, %p57
    %s60 = sadd.s32 %s59, 1
    %p63 = scmp.eq.s32.totalorder %s13, 3
    %p64 = scmp.ne.s32.totalorder %s59, %s61
    %p65 = scmp.eq.s32.totalorder %s13, 0
    %p66 = por %p64, %p65
    %p67 = scmp.ne.s32.totalorder %s59, %s61
    %p68 = scmp.eq.s32.totalorder %s18, 3
    %p69 = por %p67, %p68
    %p70 = scmp.ne.s32.totalorder %s61, %s62
    %p71 = scmp.eq.s32.totalorder %s18, 0
    %p72 = por %p70, %p71
    %p73 = scmp.ne.s32.totalorder %s61, %s62
    %p74 = scmp.eq.s32.totalorder %s19, 3
    %p75 = por %p73, %p74
    %p77 = scmp.ne.s32.totalorder %s62, %s76
    %p78 = scmp.eq.s32.totalorder %s19, 0
    %p79 = por %p77, %p78
    %s81 = sadd.s32 %s80, 1
    %p84 = scmp.eq.s32.totalorder %s13, 3
    %p85 = scmp.ne.s32.totalorder %s80, %s82
    %p86 = scmp.eq.s32.totalorder %s13, 0
    %p87 = por %p85, %p86
    %p88 = scmp.ne.s32.totalorder %s80, %s82
    %p89 = scmp.eq.s32.totalorder %s18, 3
    %p90 = por %p88, %p89
    %p91 = scmp.ne.s32.totalorder %s82, %s83
    %p92 = scmp.eq.s32.totalorder %s18, 0
    %p93 = por %p91, %p92
    %p94 = scmp.ne.s32.totalorder %s82, %s83
    %p95 = scmp.eq.s32.totalorder %s19, 3
    %p96 = por %p94, %p95
    %p98 = scmp.ne.s32.totalorder %s83, %s97
    %p99 = scmp.eq.s32.totalorder %s19, 0
    %p100 = por %p98, %p99
    %s102 = sadd.s32 %s101, 1
    %p105 = scmp.eq.s32.totalorder %s13, 3
    %p106 = scmp.ne.s32.totalorder %s101, %s103
    %p107 = scmp.eq.s32.totalorder %s13, 0
    %p108 = por %p106, %p107
    %p109 = scmp.ne.s32.totalorder %s101, %s103
    %p110 = scmp.eq.s32.totalorder %s18, 3
    %p111 = por %p109, %p110
    %p112 = scmp.ne.s32.totalorder %s103, %s104
    %p113 = scmp.eq.s32.totalorder %s18, 0
    %p114 = por %p112, %p113
    %p115 = scmp.ne.s32.totalorder %s103, %s104
    %p116 = scmp.eq.s32.totalorder %s19, 3
    %p117 = por %p115, %p116
    %p119 = scmp.ne.s32.totalorder %s104, %s118
    %p120 = scmp.eq.s32.totalorder %s19, 0
    %p121 = por %p119, %p120
    %s123 = sadd.s32 %s122, 1
    %p126 = scmp.eq.s32.totalorder %s13, 3
    %p127 = scmp.ne.s32.totalorder %s122, %s124
    %p128 = scmp.eq.s32.totalorder %s13, 0
    %p129 = por %p127, %p128
    %p130 = scmp.ne.s32.totalorder %s122, %s124
    %p131 = scmp.eq.s32.totalorder %s18, 3
    %p132 = por %p130, %p131
    %p133 = scmp.ne.s32.totalorder %s124, %s125
    %p134 = scmp.eq.s32.totalorder %s18, 0
    %p135 = por %p133, %p134
    %p136 = scmp.ne.s32.totalorder %s124, %s125
    %p137 = scmp.eq.s32.totalorder %s19, 3
    %p138 = por %p136, %p137
    %p140 = scmp.ne.s32.totalorder %s125, %s139
    %p141 = scmp.eq.s32.totalorder %s19, 0
    %p142 = por %p140, %p141
    %s144 = sadd.s32 %s143, 1
    %p147 = scmp.eq.s32.totalorder %s13, 3
    %p148 = scmp.ne.s32.totalorder %s143, %s145
    %p149 = scmp.eq.s32.totalorder %s13, 0
    %p150 = por %p148, %p149
    %p151 = scmp.ne.s32.totalorder %s143, %s145
    %p152 = scmp.eq.s32.totalorder %s18, 3
    %p153 = por %p151, %p152
    %p154 = scmp.ne.s32.totalorder %s145, %s146
    %p155 = scmp.eq.s32.totalorder %s18, 0
    %p156 = por %p154, %p155
    %p157 = scmp.ne.s32.totalorder %s145, %s146
    %p158 = scmp.eq.s32.totalorder %s19, 3
    %p159 = por %p157, %p158
    %p161 = scmp.ne.s32.totalorder %s146, %s160
    %p162 = scmp.eq.s32.totalorder %s19, 0
    %p163 = por %p161, %p162
    %s165 = sadd.s32 %s164, 1
    %p168 = scmp.eq.s32.totalorder %s13, 3
    %p169 = scmp.ne.s32.totalorder %s164, %s166
    %p170 = scmp.eq.s32.totalorder %s13, 0
    %p171 = por %p169, %p170
    %p172 = scmp.ne.s32.totalorder %s164, %s166
    %p173 = scmp.eq.s32.totalorder %s18, 3
    %p174 = por %p172, %p173
    %p175 = scmp.ne.s32.totalorder %s166, %s167
    %p176 = scmp.eq.s32.totalorder %s18, 0
    %p177 = por %p175, %p176
    %p178 = scmp.ne.s32.totalorder %s166, %s167
    %p179 = scmp.eq.s32.totalorder %s19, 3
    %p180 = por %p178, %p179
    %p182 = scmp.ne.s32.totalorder %s167, %s181
    %p183 = scmp.eq.s32.totalorder %s19, 0
    %p184 = por %p182, %p183
    %s185 = ssub.s32 %s20, %s32
    %s186 = ssub.s32 %s21, %s28
    %s187 = sor.u32 %s185, %s186
    %p188 = scmp.eq.s32.totalorder %s187, 0
    %s190 = sadd.s32 %s189, 1
    %s191 = scalar_select %p188, %s189, %s190
    %p194 = pneg %p188
    %p195 = scmp.eq.s32.totalorder %s13, 3
    %p196 = por %p194, %p195
    %p197 = scmp.ne.s32.totalorder %s189, %s192
    %p198 = scmp.eq.s32.totalorder %s13, 0
    %p199 = por %p197, %p198
    %p200 = scmp.ne.s32.totalorder %s189, %s192
    %p201 = scmp.eq.s32.totalorder %s18, 3
    %p202 = por %p200, %p201
    %p203 = scmp.ne.s32.totalorder %s192, %s193
    %p204 = scmp.eq.s32.totalorder %s18, 0
    %p205 = por %p203, %p204
    %p206 = scmp.ne.s32.totalorder %s192, %s193
    %p207 = scmp.eq.s32.totalorder %s19, 3
    %p208 = por %p206, %p207
    %p210 = scmp.ne.s32.totalorder %s193, %s209
    %p211 = scmp.eq.s32.totalorder %s19, 0
    %p212 = por %p210, %p211
    %p213 = scmp.le.s32.totalorder 1, %s13
    %p214 = scmp.lt.s32.totalorder %s13, 5
    %p215 = pnand %p213, %p214
    %p216 = pneg %p215
    // Predicated region
    $region9: #{tpu_custom_call.1} parent=5 // pred_check
      _
    $region10: #{tpu_custom_call.1} parent=5 // pred_check_branch
      %218 = sbr.rel (%p215) target = $region12
    $region11: #{tpu_custom_call.1} parent=5 // pred_region
      %s219 = ssub.s32 %s13, 1
      // Predicated region
      $region13: #{tpu_custom_call.1} parent=11 // pred_check
        %p220 = pneg %p72
      $region14: #{tpu_custom_call.1} parent=11 // pred_check_branch
        %222 = sbr.rel (%p220) target = $region16
      $region15: #{tpu_custom_call.1} parent=11 // pred_region
        _
      $region16: #{tpu_custom_call.1} parent=11 // pred_fallthru
        _
      // Predicated region
      $region17: #{tpu_custom_call.1} parent=11 // pred_check
        %p223 = pneg %p93
      $region18: #{tpu_custom_call.1} parent=11 // pred_check_branch
        %225 = sbr.rel (%p223) target = $region20
      $region19: #{tpu_custom_call.1} parent=11 // pred_region
        _
      $region20: #{tpu_custom_call.1} parent=11 // pred_fallthru
        _
      // Predicated region
      $region21: #{tpu_custom_call.1} parent=11 // pred_check
        %p226 = pneg %p114
      $region22: #{tpu_custom_call.1} parent=11 // pred_check_branch
        %228 = sbr.rel (%p226) target = $region24
      $region23: #{tpu_custom_call.1} parent=11 // pred_region
        _
      $region24: #{tpu_custom_call.1} parent=11 // pred_fallthru
        _
      // Predicated region
      $region25: #{tpu_custom_call.1} parent=11 // pred_check
        %p229 = pneg %p135
      $region26: #{tpu_custom_call.1} parent=11 // pred_check_branch
        %231 = sbr.rel (%p229) target = $region28
      $region27: #{tpu_custom_call.1} parent=11 // pred_region
        _
      $region28: #{tpu_custom_call.1} parent=11 // pred_fallthru
        _
      // Predicated region
      $region29: #{tpu_custom_call.1} parent=11 // pred_check
        %p232 = pneg %p156
      $region30: #{tpu_custom_call.1} parent=11 // pred_check_branch
        %234 = sbr.rel (%p232) target = $region32
      $region31: #{tpu_custom_call.1} parent=11 // pred_region
        _
      $region32: #{tpu_custom_call.1} parent=11 // pred_fallthru
        _
      // Predicated region
      $region33: #{tpu_custom_call.1} parent=11 // pred_check
        %p235 = pneg %p177
      $region34: #{tpu_custom_call.1} parent=11 // pred_check_branch
        %237 = sbr.rel (%p235) target = $region36
      $region35: #{tpu_custom_call.1} parent=11 // pred_region
        _
      $region36: #{tpu_custom_call.1} parent=11 // pred_fallthru
        _
    $region12: #{tpu_custom_call.1} parent=5 // pred_fallthru
      _
    %p238 = scmp.lt.s32.totalorder %s13, 4
    // Predicated region
    $region37: #{tpu_custom_call.1} parent=5 // pred_check
      %p239 = pneg %p238
    $region38: #{tpu_custom_call.1} parent=5 // pred_check_branch
      %241 = sbr.rel (%p239) target = $region40
    $region39: #{tpu_custom_call.1} parent=5 // pred_region
      // Predicated region
      $region41: #{tpu_custom_call.1} parent=39 // pred_check
        %p242 = pneg %p45
      $region42: #{tpu_custom_call.1} parent=39 // pred_check_branch
        %244 = sbr.rel (%p242) target = $region44
      $region43: #{tpu_custom_call.1} parent=39 // pred_region
        %s245 = smul.u32 4, %s20
        %p246 = scmp.lt.s32.totalorder %s245, 7
        %s247 = scalar_select %p246, %s245, 7
        %s248 = smul.addr %s247, 22
        %s249 = smul.addr %s248, 4
        %s250 = scalar_lea.vmem %s0, %s249
        %s251 = smul.u32 4, %s20
      $region44: #{tpu_custom_call.1} parent=39 // pred_fallthru
        _
    $region40: #{tpu_custom_call.1} parent=5 // pred_fallthru
      _
    %p252 = scmp.le.s32.totalorder 1, %s13
    %p253 = scmp.lt.s32.totalorder %s13, 5
    %p254 = pnand %p252, %p253
    %p255 = pneg %p254
    // Predicated region
    $region45: #{tpu_custom_call.1} parent=5 // pred_check
      _
    $region46: #{tpu_custom_call.1} parent=5 // pred_check_branch
      %257 = sbr.rel (%p254) target = $region48
    $region47: #{tpu_custom_call.1} parent=5 // pred_region
      %s258 = ssub.s32 %s13, 1
      %s259 = smul.u32 4, %s22
      %p260 = scmp.lt.s32.totalorder %s259, 7
      %s261 = scalar_select %p260, %s259, 7
      %s262 = smul.addr %s261, 22
      %s263 = smul.addr %s262, 4
      %s264 = scalar_lea.vmem %s0, %s263
      %p265 = pneg %p51
      %p266 = pneg %p48
      %p267 = pneg %p72
      %p268 = pneg %p69
      %p269 = pneg %p93
      %p270 = pneg %p90
      %p271 = pneg %p114
      %p272 = pneg %p111
      %p273 = pneg %p135
      %p274 = pneg %p132
      %p275 = pneg %p156
      %p276 = pneg %p153
      %p277 = pneg %p177
      %p278 = pneg %p174
      %p279 = pneg %p205
      %p280 = pneg %p202
      %s281 = smul.u32 4, %s23
      %p282 = scmp.lt.s32.totalorder %s22, 1
      %s283 = scalar_select %p282, %s22, 1
      %p284 = scmp.lt.s32.totalorder %s281, 7
      %s285 = scalar_select %p284, %s281, 7
      %s286 = smul.addr %s283, 8
      %s287 = sadd.s32 %s285, %s286
      %s288 = smul.addr %s287, 4
      %s289 = scalar_lea.vmem %s7, %s288
      %s290 = smul.u32 4, %s22
      %p291 = scmp.lt.s32.totalorder %s290, 7
      %s292 = scalar_select %p291, %s290, 7
      %s293 = smul.addr %s292, 22
      %s294 = smul.addr %s293, 4
      %s295 = scalar_lea.vmem %s0, %s294
      %s296 = smul.u32 4, %s22
      %s297 = smul.u32 4, %s23
      %p298 = scmp.lt.s32.totalorder %s22, 1
      %s299 = scalar_select %p298, %s22, 1
      %p300 = scmp.lt.s32.totalorder %s297, 7
      %s301 = scalar_select %p300, %s297, 7
      %s302 = smul.addr %s299, 8
      %s303 = sadd.s32 %s301, %s302
      %s304 = smul.addr %s303, 4
      %s305 = scalar_lea.vmem %s7, %s304
      %s306 = smul.u32 4, %s23
      %s308 = smul.u32 %s23, 4
      %s309 = smul.u32 %s308, 2
      %s310 = smul.addr %s309, 4
      %s311 = scalar_lea.vmem %s295, %s310
      %v312 = vld [vmem:[%s311] sm:$0xf]
      %v313 = vld [vmem:[%s311 + $0x8] sm:$0xf]
      %v314 = vld [vmem:[%s311 + $0x10] sm:$0xf]
      %v315 = vld [vmem:[%s311 + $0x18] sm:$0xf]
      %v316 = vld [vmem:[%s311 + $0x20] sm:$0xf]
      %v317 = vld [vmem:[%s311 + $0x28] sm:$0xf]
      %s318 = sadd.s32 %s309, 22
      %s319 = smul.addr %s318, 4
      %s320 = scalar_lea.vmem %s295, %s319
      %v321 = vld [vmem:[%s320] sm:$0xf]
      %v322 = vld [vmem:[%s320 + $0x8] sm:$0xf]
      %v323 = vld [vmem:[%s320 + $0x10] sm:$0xf]
      %v324 = vld [vmem:[%s320 + $0x18] sm:$0xf]
      %v325 = vld [vmem:[%s320 + $0x20] sm:$0xf]
      %v326 = vld [vmem:[%s320 + $0x28] sm:$0xf]
      %v327 = vld [vmem:[%s311 + $0x4] sm:$0x1]
      %v328 = vld [vmem:[%s311 + $0xc] sm:$0x1]
      %v329 = vld [vmem:[%s311 + $0x14] sm:$0x1]
      %v330 = vld [vmem:[%s311 + $0x1c] sm:$0x1]
      %v331 = vld [vmem:[%s311 + $0x24] sm:$0x1]
      %v332 = vld [vmem:[%s311 + $0x2c] sm:$0x1]
      %vm333 = vsmask.f32 3328
      %vm334 = vsmask.f32 7440
      %vm335 = vmor %vm333, %vm334
      %v337 = vshrl.u32 %v312, 16
      %v339 = vrot.slane %v337, 4
      %v340 = vshll.u32 %v312, 16
      %v342 = vrot.slane %v340, 5
      %v343 = vor.u32 %v339, %v342
      %v344 = vrot.slane %v343, 4
      %v346 = vshll.u32 %v327, 16
      %v348 = vrot.slane %v346, 5
      %v349 = vsel %vm335, %v344, %v348
      %v351 = vshrl.u32 %v313, 16
      %v353 = vrot.slane %v351, 4
      %v354 = vshll.u32 %v313, 16
      %v356 = vrot.slane %v354, 5
      %v357 = vor.u32 %v353, %v356
      %v358 = vrot.slane %v357, 4
      %v360 = vshll.u32 %v328, 16
      %v362 = vrot.slane %v360, 5
      %v363 = vsel %vm335, %v358, %v362
      %v365 = vshrl.u32 %v314, 16
      %v367 = vrot.slane %v365, 4
      %v368 = vshll.u32 %v314, 16
      %v370 = vrot.slane %v368, 5
      %v371 = vor.u32 %v367, %v370
      %v372 = vrot.slane %v371, 4
      %v374 = vshll.u32 %v329, 16
      %v376 = vrot.slane %v374, 5
      %v377 = vsel %vm335, %v372, %v376
      %v379 = vshrl.u32 %v315, 16
      %v381 = vrot.slane %v379, 4
      %v382 = vshll.u32 %v315, 16
      %v384 = vrot.slane %v382, 5
      %v385 = vor.u32 %v381, %v384
      %v386 = vrot.slane %v385, 4
      %v388 = vshll.u32 %v330, 16
      %v390 = vrot.slane %v388, 5
      %v391 = vsel %vm335, %v386, %v390
      %v393 = vshrl.u32 %v316, 16
      %v395 = vrot.slane %v393, 4
      %v396 = vshll.u32 %v316, 16
      %v398 = vrot.slane %v396, 5
      %v399 = vor.u32 %v395, %v398
      %v400 = vrot.slane %v399, 4
      %v402 = vshll.u32 %v331, 16
      %v404 = vrot.slane %v402, 5
      %v405 = vsel %vm335, %v400, %v404
      %v407 = vshrl.u32 %v317, 16
      %v409 = vrot.slane %v407, 4
      %v410 = vshll.u32 %v317, 16
      %v412 = vrot.slane %v410, 5
      %v413 = vor.u32 %v409, %v412
      %v414 = vrot.slane %v413, 4
      %v416 = vshll.u32 %v332, 16
      %v418 = vrot.slane %v416, 5
      %v419 = vsel %vm335, %v414, %v418
      %s420 = sadd.s32 %s309, 44
      %s421 = smul.addr %s420, 4
      %s422 = scalar_lea.vmem %s295, %s421
      %v423 = vld [vmem:[%s422] sm:$0xf]
      %v424 = vld [vmem:[%s422 + $0x8] sm:$0xf]
      %v425 = vld [vmem:[%s422 + $0x10] sm:$0xf]
      %v426 = vld [vmem:[%s422 + $0x18] sm:$0xf]
      %v427 = vld [vmem:[%s422 + $0x20] sm:$0xf]
      %v428 = vld [vmem:[%s422 + $0x28] sm:$0xf]
      %s429 = sadd.s32 %s309, 66
      %s430 = smul.addr %s429, 4
      %s431 = scalar_lea.vmem %s295, %s430
      %v432 = vld [vmem:[%s431] sm:$0xf]
      %v433 = vld [vmem:[%s431 + $0x8] sm:$0xf]
      %v434 = vld [vmem:[%s431 + $0x10] sm:$0xf]
      %v435 = vld [vmem:[%s431 + $0x18] sm:$0xf]
      %v436 = vld [vmem:[%s431 + $0x20] sm:$0xf]
      %v437 = vld [vmem:[%s431 + $0x28] sm:$0xf]
      %v438 = vld [vmem:[%s422 + $0x4] sm:$0x1]
      %v439 = vld [vmem:[%s422 + $0xc] sm:$0x1]
      %v440 = vld [vmem:[%s422 + $0x14] sm:$0x1]
      %v441 = vld [vmem:[%s422 + $0x1c] sm:$0x1]
      %v442 = vld [vmem:[%s422 + $0x24] sm:$0x1]
      %v443 = vld [vmem:[%s422 + $0x2c] sm:$0x1]
      %v445 = vshrl.u32 %v423, 16
      %v447 = vrot.slane %v445, 4
      %v448 = vshll.u32 %v423, 16
      %v450 = vrot.slane %v448, 5
      %v451 = vor.u32 %v447, %v450
      %v452 = vrot.slane %v451, 4
      %v454 = vshll.u32 %v438, 16
      %v456 = vrot.slane %v454, 5
      %v457 = vsel %vm335, %v452, %v456
      %v459 = vshrl.u32 %v424, 16
      %v461 = vrot.slane %v459, 4
      %v462 = vshll.u32 %v424, 16
      %v464 = vrot.slane %v462, 5
      %v465 = vor.u32 %v461, %v464
      %v466 = vrot.slane %v465, 4
      %v468 = vshll.u32 %v439, 16
      %v470 = vrot.slane %v468, 5
      %v471 = vsel %vm335, %v466, %v470
      %v473 = vshrl.u32 %v425, 16
      %v475 = vrot.slane %v473, 4
      %v476 = vshll.u32 %v425, 16
      %v478 = vrot.slane %v476, 5
      %v479 = vor.u32 %v475, %v478
      %v480 = vrot.slane %v479, 4
      %v482 = vshll.u32 %v440, 16
      %v484 = vrot.slane %v482, 5
      %v485 = vsel %vm335, %v480, %v484
      %v487 = vshrl.u32 %v426, 16
      %v489 = vrot.slane %v487, 4
      %v490 = vshll.u32 %v426, 16
      %v492 = vrot.slane %v490, 5
      %v493 = vor.u32 %v489, %v492
      %v494 = vrot.slane %v493, 4
      %v496 = vshll.u32 %v441, 16
      %v498 = vrot.slane %v496, 5
      %v499 = vsel %vm335, %v494, %v498
      %v501 = vshrl.u32 %v427, 16
      %v503 = vrot.slane %v501, 4
      %v504 = vshll.u32 %v427, 16
      %v506 = vrot.slane %v504, 5
      %v507 = vor.u32 %v503, %v506
      %v508 = vrot.slane %v507, 4
      %v510 = vshll.u32 %v442, 16
      %v512 = vrot.slane %v510, 5
      %v513 = vsel %vm335, %v508, %v512
      %v515 = vshrl.u32 %v428, 16
      %v517 = vrot.slane %v515, 4
      %v518 = vshll.u32 %v428, 16
      %v520 = vrot.slane %v518, 5
      %v521 = vor.u32 %v517, %v520
      %v522 = vrot.slane %v521, 4
      %v524 = vshll.u32 %v443, 16
      %v526 = vrot.slane %v524, 5
      %v527 = vsel %vm335, %v522, %v526
      %s528 = sadd.s32 %s308, 1
      %s529 = smul.u32 %s528, 2
      %s530 = smul.addr %s529, 4
      %s531 = scalar_lea.vmem %s295, %s530
      %v532 = vld [vmem:[%s531] sm:$0xf]
      %v533 = vld [vmem:[%s531 + $0x8] sm:$0xf]
      %v534 = vld [vmem:[%s531 + $0x10] sm:$0xf]
      %v535 = vld [vmem:[%s531 + $0x18] sm:$0xf]
      %v536 = vld [vmem:[%s531 + $0x20] sm:$0xf]
      %v537 = vld [vmem:[%s531 + $0x28] sm:$0xf]
      %s538 = sadd.s32 %s529, 22
      %s539 = smul.addr %s538, 4
      %s540 = scalar_lea.vmem %s295, %s539
      %v541 = vld [vmem:[%s540] sm:$0xf]
      %v542 = vld [vmem:[%s540 + $0x8] sm:$0xf]
      %v543 = vld [vmem:[%s540 + $0x10] sm:$0xf]
      %v544 = vld [vmem:[%s540 + $0x18] sm:$0xf]
      %v545 = vld [vmem:[%s540 + $0x20] sm:$0xf]
      %v546 = vld [vmem:[%s540 + $0x28] sm:$0xf]
      %v547 = vld [vmem:[%s531 + $0x4] sm:$0x1]
      %v548 = vld [vmem:[%s531 + $0xc] sm:$0x1]
      %v549 = vld [vmem:[%s531 + $0x14] sm:$0x1]
      %v550 = vld [vmem:[%s531 + $0x1c] sm:$0x1]
      %v551 = vld [vmem:[%s531 + $0x24] sm:$0x1]
      %v552 = vld [vmem:[%s531 + $0x2c] sm:$0x1]
      %v554 = vshrl.u32 %v532, 16
      %v556 = vrot.slane %v554, 4
      %v557 = vshll.u32 %v532, 16
      %v559 = vrot.slane %v557, 5
      %v560 = vor.u32 %v556, %v559
      %v561 = vrot.slane %v560, 4
      %v563 = vshll.u32 %v547, 16
      %v565 = vrot.slane %v563, 5
      %v566 = vsel %vm335, %v561, %v565
      %v568 = vshrl.u32 %v533, 16
      %v570 = vrot.slane %v568, 4
      %v571 = vshll.u32 %v533, 16
      %v573 = vrot.slane %v571, 5
      %v574 = vor.u32 %v570, %v573
      %v575 = vrot.slane %v574, 4
      %v577 = vshll.u32 %v548, 16
      %v579 = vrot.slane %v577, 5
      %v580 = vsel %vm335, %v575, %v579
      %v582 = vshrl.u32 %v534, 16
      %v584 = vrot.slane %v582, 4
      %v585 = vshll.u32 %v534, 16
      %v587 = vrot.slane %v585, 5
      %v588 = vor.u32 %v584, %v587
      %v589 = vrot.slane %v588, 4
      %v591 = vshll.u32 %v549, 16
      %v593 = vrot.slane %v591, 5
      %v594 = vsel %vm335, %v589, %v593
      %v596 = vshrl.u32 %v535, 16
      %v598 = vrot.slane %v596, 4
      %v599 = vshll.u32 %v535, 16
      %v601 = vrot.slane %v599, 5
      %v602 = vor.u32 %v598, %v601
      %v603 = vrot.slane %v602, 4
      %v605 = vshll.u32 %v550, 16
      %v607 = vrot.slane %v605, 5
      %v608 = vsel %vm335, %v603, %v607
      %v610 = vshrl.u32 %v536, 16
      %v612 = vrot.slane %v610, 4
      %v613 = vshll.u32 %v536, 16
      %v615 = vrot.slane %v613, 5
      %v616 = vor.u32 %v612, %v615
      %v617 = vrot.slane %v616, 4
      %v619 = vshll.u32 %v551, 16
      %v621 = vrot.slane %v619, 5
      %v622 = vsel %vm335, %v617, %v621
      %v624 = vshrl.u32 %v537, 16
      %v626 = vrot.slane %v624, 4
      %v627 = vshll.u32 %v537, 16
      %v629 = vrot.slane %v627, 5
      %v630 = vor.u32 %v626, %v629
      %v631 = vrot.slane %v630, 4
      %v633 = vshll.u32 %v552, 16
      %v635 = vrot.slane %v633, 5
      %v636 = vsel %vm335, %v631, %v635
      %v643 = vunpack.c.l.b16 %v312
      %v644 = vunpack.c.l.b16 %v313
      %v645 = vunpack.c.l.b16 %v314
      %v646 = vunpack.c.l.b16 %v315
      %v647 = vunpack.c.l.b16 %v316
      %v648 = vunpack.c.l.b16 %v317
      %v649 = vpack.c.b16 %v644, %v643
      %v650 = vpack.c.b16 %v646, %v645
      %v651 = vpack.c.b16 %v648, %v647
      %v658 = vunpack.c.l.b16 %v321
      %v659 = vunpack.c.l.b16 %v322
      %v660 = vunpack.c.l.b16 %v323
      %v661 = vunpack.c.l.b16 %v324
      %v662 = vunpack.c.l.b16 %v325
      %v663 = vunpack.c.l.b16 %v326
      %v664 = vpack.c.b16 %v659, %v658
      %v665 = vpack.c.b16 %v661, %v660
      %v666 = vpack.c.b16 %v663, %v662
      %667 = vrot.lane.b32.xlu0 %v664, 4
      %v668 = vpop.permute.xlu0 %667
      %669 = vrot.lane.b32.xlu0 %v665, 4
      %v670 = vpop.permute.xlu0 %669
      %671 = vrot.lane.b32.xlu0 %v666, 4
      %v672 = vpop.permute.xlu0 %671
      %v673 = vunpack.c.l.b16 %v349
      %v674 = vunpack.c.l.b16 %v363
      %v675 = vunpack.c.l.b16 %v377
      %v676 = vunpack.c.l.b16 %v391
      %v677 = vunpack.c.l.b16 %v405
      %v678 = vunpack.c.l.b16 %v419
      %v679 = vpack.c.b16 %v674, %v673
      %v680 = vpack.c.b16 %v676, %v675
      %v681 = vpack.c.b16 %v678, %v677
      %682 = vrot.lane.b32.xlu0 %v679, 8
      %v683 = vpop.permute.xlu0 %682
      %684 = vrot.lane.b32.xlu0 %v680, 8
      %v685 = vpop.permute.xlu0 %684
      %686 = vrot.lane.b32.xlu0 %v681, 8
      %v687 = vpop.permute.xlu0 %686
      %v694 = vunpack.c.l.b16 %v423
      %v695 = vunpack.c.l.b16 %v424
      %v696 = vunpack.c.l.b16 %v425
      %v697 = vunpack.c.l.b16 %v426
      %v698 = vunpack.c.l.b16 %v427
      %v699 = vunpack.c.l.b16 %v428
      %v700 = vpack.c.b16 %v695, %v694
      %v701 = vpack.c.b16 %v697, %v696
      %v702 = vpack.c.b16 %v699, %v698
      %703 = vrot.lane.b32.xlu0 %v700, 12
      %v704 = vpop.permute.xlu0 %703
      %705 = vrot.lane.b32.xlu0 %v701, 12
      %v706 = vpop.permute.xlu0 %705
      %707 = vrot.lane.b32.xlu0 %v702, 12
      %v708 = vpop.permute.xlu0 %707
      %v715 = vunpack.c.l.b16 %v432
      %v716 = vunpack.c.l.b16 %v433
      %v717 = vunpack.c.l.b16 %v434
      %v718 = vunpack.c.l.b16 %v435
      %v719 = vunpack.c.l.b16 %v436
      %v720 = vunpack.c.l.b16 %v437
      %v721 = vpack.c.b16 %v716, %v715
      %v722 = vpack.c.b16 %v718, %v717
      %v723 = vpack.c.b16 %v720, %v719
      %724 = vrot.lane.b32.xlu0 %v721, 16
      %v725 = vpop.permute.xlu0 %724
      %726 = vrot.lane.b32.xlu0 %v722, 16
      %v727 = vpop.permute.xlu0 %726
      %728 = vrot.lane.b32.xlu0 %v723, 16
      %v729 = vpop.permute.xlu0 %728
      %v730 = vunpack.c.l.b16 %v457
      %v731 = vunpack.c.l.b16 %v471
      %v732 = vunpack.c.l.b16 %v485
      %v733 = vunpack.c.l.b16 %v499
      %v734 = vunpack.c.l.b16 %v513
      %v735 = vunpack.c.l.b16 %v527
      %v736 = vpack.c.b16 %v731, %v730
      %v737 = vpack.c.b16 %v733, %v732
      %v738 = vpack.c.b16 %v735, %v734
      %739 = vrot.lane.b32.xlu0 %v736, 20
      %v740 = vpop.permute.xlu0 %739
      %741 = vrot.lane.b32.xlu0 %v737, 20
      %v742 = vpop.permute.xlu0 %741
      %743 = vrot.lane.b32.xlu0 %v738, 20
      %v744 = vpop.permute.xlu0 %743
      %v751 = vunpack.c.l.b16 %v532
      %v752 = vunpack.c.l.b16 %v533
      %v753 = vunpack.c.l.b16 %v534
      %v754 = vunpack.c.l.b16 %v535
      %v755 = vunpack.c.l.b16 %v536
      %v756 = vunpack.c.l.b16 %v537
      %v757 = vpack.c.b16 %v752, %v751
      %v758 = vpack.c.b16 %v754, %v753
      %v759 = vpack.c.b16 %v756, %v755
      %760 = vrot.lane.b32.xlu0 %v757, 24
      %v761 = vpop.permute.xlu0 %760
      %762 = vrot.lane.b32.xlu0 %v758, 24
      %v763 = vpop.permute.xlu0 %762
      %764 = vrot.lane.b32.xlu0 %v759, 24
      %v765 = vpop.permute.xlu0 %764
      %v772 = vunpack.c.l.b16 %v541
      %v773 = vunpack.c.l.b16 %v542
      %v774 = vunpack.c.l.b16 %v543
      %v775 = vunpack.c.l.b16 %v544
      %v776 = vunpack.c.l.b16 %v545
      %v777 = vunpack.c.l.b16 %v546
      %v778 = vpack.c.b16 %v773, %v772
      %v779 = vpack.c.b16 %v775, %v774
      %v780 = vpack.c.b16 %v777, %v776
      %781 = vrot.lane.b32.xlu0 %v778, 28
      %v782 = vpop.permute.xlu0 %781
      %783 = vrot.lane.b32.xlu0 %v779, 28
      %v784 = vpop.permute.xlu0 %783
      %785 = vrot.lane.b32.xlu0 %v780, 28
      %v786 = vpop.permute.xlu0 %785
      %v787 = vunpack.c.l.b16 %v566
      %v788 = vunpack.c.l.b16 %v580
      %v789 = vunpack.c.l.b16 %v594
      %v790 = vunpack.c.l.b16 %v608
      %v791 = vunpack.c.l.b16 %v622
      %v792 = vunpack.c.l.b16 %v636
      %v793 = vpack.c.b16 %v788, %v787
      %v794 = vpack.c.b16 %v790, %v789
      %v795 = vpack.c.b16 %v792, %v791
      %796 = vrot.lane.b32.xlu0 %v793, 32
      %v797 = vpop.permute.xlu0 %796
      %798 = vrot.lane.b32.xlu0 %v794, 32
      %v799 = vpop.permute.xlu0 %798
      %800 = vrot.lane.b32.xlu0 %v795, 32
      %v801 = vpop.permute.xlu0 %800
      %vm802 = vcmask 31744
      %v805 = vsel %vm802, %v649, %v668
      %v808 = vsel %vm802, %v650, %v670
      %v811 = vsel %vm802, %v651, %v672
      %vm812 = vcmask 64512
      %v814 = vsel %vm812, %v805, %v683
      %v816 = vsel %vm812, %v808, %v685
      %v818 = vsel %vm812, %v811, %v687
      %vm819 = vcmask 97280
      %v821 = vsel %vm819, %v814, %v704
      %v823 = vsel %vm819, %v816, %v706
      %v825 = vsel %vm819, %v818, %v708
      %vm826 = vcmask 130048
      %v828 = vsel %vm826, %v821, %v725
      %v830 = vsel %vm826, %v823, %v727
      %v832 = vsel %vm826, %v825, %v729
      %vm833 = vcmask 162816
      %v835 = vsel %vm833, %v828, %v740
      %v837 = vsel %vm833, %v830, %v742
      %v839 = vsel %vm833, %v832, %v744
      %vm840 = vcmask 195584
      %v842 = vsel %vm840, %v835, %v761
      %v844 = vsel %vm840, %v837, %v763
      %v846 = vsel %vm840, %v839, %v765
      %vm847 = vcmask 228352
      %v849 = vsel %vm847, %v842, %v782
      %v851 = vsel %vm847, %v844, %v784
      %v853 = vsel %vm847, %v846, %v786
      %vm854 = vcmask 261120
      %v856 = vsel %vm854, %v849, %v797
      %v858 = vsel %vm854, %v851, %v799
      %v860 = vsel %vm854, %v853, %v801
      %v861 = vld [vmem:[%s1] sm:$0xf]
      %v862 = vld [vmem:[%s1 + $0x4] sm:$0xf]
      %v863 = vld [vmem:[%s1 + $0x8] sm:$0xf]
      %v864 = vld [vmem:[%s1 + $0xc] sm:$0xf]
      %v865 = vld [vmem:[%s1 + $0x10] sm:$0x3]
      %v866 = vld [vmem:[%s2] sm:$0x1]
      %v868 = vlaneseq
      %v869 = vshrl.u32 %v868, 7
      %v870 = vsub.s32 0, %v869
      %v871 = vrot.slane %v866, %v870
      %v878 = vunpack.c.l.b16 %v861
      %v879 = vunpack.c.l.b16 %v862
      %v880 = vunpack.c.l.b16 %v863
      %v881 = vunpack.c.l.b16 %v864
      %v882 = vunpack.c.l.b16 %v865
      %v883 = vpack.c.b16 %v879, %v878
      %v884 = vpack.c.b16 %v881, %v880
      %v885 = vpack.c.b16 %v882, %v882
      %vm888 = vcmask 293888
      %v889 = vsel %vm888, %v856, 0
      %v891 = vsel %vm888, %v858, 0
      %v893 = vsel %vm888, %v860, 0
      %vm895 = vcmask 1041408
      %v897 = vsel %vm895, %v885, 0
      %899 = vmatprep.subr.bf16.mxu0 0
      %900 = vmatpush1.bf16.msra.mxu0 %v883
      %901 = vmatprep.subr.bf16.mxu0 0
      %902 = vmatpush1.bf16.msra.mxu0 %v884
      %903 = vmatprep.subr.bf16.mxu0 0
      %904 = vmatpush1.bf16.msra.mxu0 %v897
      %905 = vmatprep.subr.bf16.mxu0 0
      %906 = vmatpush1.bf16.msra.mxu0 0
      %907 = vmatprep.subr.bf16.mxu0 0
      %908 = vmatpush1.bf16.msra.mxu0 0
      %909 = vmatprep.subr.bf16.mxu0 0
      %910 = vmatpush1.bf16.msra.mxu0 0
      %911 = vmatprep.subr.bf16.mxu0 0
      %912 = vmatpush1.bf16.msra.mxu0 0
      %913 = vmatprep.subr.bf16.mxu0 0
      %914 = vmatpush1.bf16.msra.mxu0 0
      %915 = vmatprep.subr.bf16.mxu0 0
      %916 = vmatpush1.bf16.msra.mxu0 0
      %917 = vmatprep.subr.bf16.mxu0 0
      %918 = vmatpush1.bf16.msra.mxu0 0
      %919 = vmatprep.subr.bf16.mxu0 0
      %920 = vmatpush1.bf16.msra.mxu0 0
      %921 = vmatprep.subr.bf16.mxu0 0
      %922 = vmatpush1.bf16.msra.mxu0 0
      %923 = vmatprep.subr.bf16.mxu0 0
      %924 = vmatpush1.bf16.msra.mxu0 0
      %925 = vmatprep.subr.bf16.mxu0 0
      %926 = vmatpush1.bf16.msra.mxu0 0
      %927 = vmatprep.subr.bf16.mxu0 0
      %928 = vmatpush1.bf16.msra.mxu0 0
      %929 = vmatprep.subr.bf16.mxu0 0
      %930 = vmatpush1.bf16.msra.mxu0 0
      %931 = vmatprep.mubr.bf16.mxu0 0
      %932 = vmatmul.mubr.bf16.gmra.mrb[0].mxu0 %v889
      %v933 = vpop.f32.mrb[0].mxu0
      %v934 = vadd.f32 %v871, %v933
      %v935 = vpop.f32.mrb[0].mxu0
      %v936 = vpop.f32.mrb[0].mxu0
      %v937 = vadd.f32 %v871, %v936
      %v938 = vpop.f32.mrb[0].mxu0
      %939 = vmatprep.mubr.bf16.mxu0 0
      %940 = vmatmul.mubr.bf16.gmra.mrb[0].mxu0 %v891
      %v941 = vpop.f32.mrb[0].mxu0
      %v942 = vadd.f32 %v871, %v941
      %v943 = vpop.f32.mrb[0].mxu0
      %v944 = vpop.f32.mrb[0].mxu0
      %v945 = vadd.f32 %v871, %v944
      %v946 = vpop.f32.mrb[0].mxu0
      %947 = vmatprep.mubr.bf16.mxu0 0
      %948 = vmatmul.mubr.bf16.gmra.mrb[0].mxu0 %v893
      %v949 = vpop.f32.mrb[0].mxu0
      %v950 = vadd.f32 %v871, %v949
      %v951 = vpop.f32.mrb[0].mxu0
      %v952 = vpop.f32.mrb[0].mxu0
      %v953 = vadd.f32 %v871, %v952
      %v954 = vpop.f32.mrb[0].mxu0
      %955 = vdwg.mxu0
      %v956 = vsub.f32 0.0, %v934
      %v957 = vsub.f32 0.0, %v937
      %v958 = vsub.f32 0.0, %v942
      %v959 = vsub.f32 0.0, %v945
      %v960 = vsub.f32 0.0, %v950
      %v961 = vsub.f32 0.0, %v953
      %v962 = vmul.f32 %v956, 1.442695
      %v963 = vpow.pop %v962
      %v964 = vmul.f32 %v957, 1.442695
      %v965 = vpow.pop %v964
      %v966 = vmul.f32 %v958, 1.442695
      %v967 = vpow.pop %v966
      %v968 = vmul.f32 %v959, 1.442695
      %v969 = vpow.pop %v968
      %v970 = vmul.f32 %v960, 1.442695
      %v971 = vpow.pop %v970
      %v972 = vmul.f32 %v961, 1.442695
      %v973 = vpow.pop %v972
      %v974 = vadd.f32 %v963, 1.0
      %v975 = vadd.f32 %v965, 1.0
      %v976 = vadd.f32 %v967, 1.0
      %v977 = vadd.f32 %v969, 1.0
      %v978 = vadd.f32 %v971, 1.0
      %v979 = vadd.f32 %v973, 1.0
      %v980 = vrcp.pop %v974
      %v981 = vrcp.pop %v975
      %v982 = vrcp.pop %v976
      %v983 = vrcp.pop %v977
      %v984 = vrcp.pop %v978
      %v985 = vrcp.pop %v979
      %v986 = vmul.f32 %v934, %v980
      %v987 = vmul.f32 %v937, %v981
      %v988 = vmul.f32 %v942, %v982
      %v989 = vmul.f32 %v945, %v983
      %v990 = vmul.f32 %v950, %v984
      %v991 = vmul.f32 %v953, %v985
      %s992 = ssub.s32 %s308, 1
      %v993 = vstv %s992
      %v994 = vadd.s32 %v993, 1
      %v995 = vadd.s32 %v993, 2
      %v996 = vadd.s32 %v993, 3
      %v997 = vadd.s32 %v993, 4
      %v998 = vadd.s32 %v993, 5
      %vm999 = vcmp.ge.s32.totalorder %v993, 0
      %vm1000 = vcmp.ge.s32.totalorder %v994, 0
      %vm1001 = vcmp.ge.s32.totalorder %v995, 0
      %vm1002 = vcmp.ge.s32.totalorder %v996, 0
      %vm1003 = vcmp.ge.s32.totalorder %v997, 0
      %vm1004 = vcmp.ge.s32.totalorder %v998, 0
      %vm1005 = vcmp.lt.s32.totalorder %v993, 8
      %vm1006 = vcmp.lt.s32.totalorder %v994, 8
      %vm1007 = vcmp.lt.s32.totalorder %v995, 8
      %vm1008 = vcmp.lt.s32.totalorder %v996, 8
      %vm1009 = vcmp.lt.s32.totalorder %v997, 8
      %vm1010 = vcmp.lt.s32.totalorder %v998, 8
      %vm1011 = vmand %vm999, %vm1005
      %vm1012 = vmand %vm1000, %vm1006
      %vm1013 = vmand %vm1001, %vm1007
      %vm1014 = vmand %vm1002, %vm1008
      %vm1015 = vmand %vm1003, %vm1009
      %vm1016 = vmand %vm1004, %vm1010
      %v1017 = vsel %vm1011, 1, 0
      %v1018 = vsel %vm1012, 1, 0
      %v1019 = vsel %vm1013, 1, 0
      %v1020 = vsel %vm1014, 1, 0
      %v1021 = vsel %vm1015, 1, 0
      %v1022 = vsel %vm1016, 1, 0
      %vm1023 = vcmp.eq.s32.totalorder %v1017, 1
      %vm1024 = vcmp.eq.s32.totalorder %v1018, 1
      %vm1025 = vcmp.eq.s32.totalorder %v1019, 1
      %vm1026 = vcmp.eq.s32.totalorder %v1020, 1
      %vm1027 = vcmp.eq.s32.totalorder %v1021, 1
      %vm1028 = vcmp.eq.s32.totalorder %v1022, 1
      %v1029 = vsel %vm1023, %v986, 0.0
      %v1030 = vsel %vm1024, %v987, 0.0
      %v1031 = vsel %vm1025, %v988, 0.0
      %v1032 = vsel %vm1026, %v989, 0.0
      %v1033 = vsel %vm1027, %v990, 0.0
      %v1034 = vsel %vm1028, %v991, 0.0
      %vm1035 = vcmask 57344
      %vm1036 = vsmask.f32 256
      %vm1037 = vmand %vm1035, %vm1036
      %v1038 = vld [vmem:[#allocation2] sm:$0x1]
      %v1039 = vsel %vm1037, 0, %v1038
      %1040 = vst [vmem:[#allocation2] sm:$0x1] %v1039
      %v1041 = vld [vmem:[#allocation2 + $0x8] sm:$0x1]
      %v1042 = vsel %vm1037, 0, %v1041
      %1043 = vst [vmem:[#allocation2 + $0x8] sm:$0x1] %v1042
      %v1044 = vld [vmem:[#allocation2 + $0x10] sm:$0x1]
      %v1045 = vsel %vm1037, 0, %v1044
      %1046 = vst [vmem:[#allocation2 + $0x10] sm:$0x1] %v1045
      %v1047 = vld [vmem:[#allocation2 + $0x18] sm:$0x1]
      %v1048 = vsel %vm1037, 0, %v1047
      %1049 = vst [vmem:[#allocation2 + $0x18] sm:$0x1] %v1048
      %v1050 = vld [vmem:[#allocation2 + $0x20] sm:$0x1]
      %v1051 = vsel %vm1037, 0, %v1050
      %1052 = vst [vmem:[#allocation2 + $0x20] sm:$0x1] %v1051
      %v1053 = vld [vmem:[#allocation2 + $0x28] sm:$0x1]
      %v1054 = vsel %vm1037, 0, %v1053
      %1055 = vst [vmem:[#allocation2 + $0x28] sm:$0x1] %v1054
      %vm1056 = vsmask.f32 7938
      %vm1057 = vmand %vm1035, %vm1056
      %v1058 = vld [vmem:[#allocation2 + $0x4] sm:$0x1]
      %v1059 = vsel %vm1057, 0, %v1058
      %1060 = vst [vmem:[#allocation2 + $0x4] sm:$0x1] %v1059
      %v1061 = vld [vmem:[#allocation2 + $0xc] sm:$0x1]
      %v1062 = vsel %vm1057, 0, %v1061
      %1063 = vst [vmem:[#allocation2 + $0xc] sm:$0x1] %v1062
      %v1064 = vld [vmem:[#allocation2 + $0x14] sm:$0x1]
      %v1065 = vsel %vm1057, 0, %v1064
      %1066 = vst [vmem:[#allocation2 + $0x14] sm:$0x1] %v1065
      %v1067 = vld [vmem:[#allocation2 + $0x1c] sm:$0x1]
      %v1068 = vsel %vm1057, 0, %v1067
      %1069 = vst [vmem:[#allocation2 + $0x1c] sm:$0x1] %v1068
      %v1070 = vld [vmem:[#allocation2 + $0x24] sm:$0x1]
      %v1071 = vsel %vm1057, 0, %v1070
      %1072 = vst [vmem:[#allocation2 + $0x24] sm:$0x1] %v1071
      %v1073 = vld [vmem:[#allocation2 + $0x2c] sm:$0x1]
      %v1074 = vsel %vm1057, 0, %v1073
      %1075 = vst [vmem:[#allocation2 + $0x2c] sm:$0x1] %v1074
      %v1076 = vpack.c.bf16 %v1029, %v1029
      %v1077 = vpack.c.bf16 %v1030, %v1030
      %v1078 = vpack.c.bf16 %v1031, %v1031
      %v1079 = vpack.c.bf16 %v1032, %v1032
      %v1080 = vpack.c.bf16 %v1033, %v1033
      %v1081 = vpack.c.bf16 %v1034, %v1034
      %v1088 = vunpack.c.l.b16 %v1076
      %v1089 = vunpack.c.l.b16 %v1077
      %v1090 = vunpack.c.l.b16 %v1078
      %v1091 = vunpack.c.l.b16 %v1079
      %v1092 = vunpack.c.l.b16 %v1080
      %v1093 = vunpack.c.l.b16 %v1081
      %v1094 = vpack.c.b16 %v1088, %v1088
      %v1095 = vpack.c.b16 %v1089, %v1089
      %v1096 = vpack.c.b16 %v1090, %v1090
      %v1097 = vpack.c.b16 %v1091, %v1091
      %v1098 = vpack.c.b16 %v1092, %v1092
      %v1099 = vpack.c.b16 %v1093, %v1093
      %v1101 = vshrl.u32 %v1094, 16
      %v1103 = vrot.slane %v1101, 7
      %v1104 = vshll.u32 %v1094, 16
      %v1106 = vor.u32 %v1103, %v1104
      %v1107 = vrot.slane %v1103, 4
      %v1109 = vshrl.u32 %v1095, 16
      %v1111 = vrot.slane %v1109, 7
      %v1112 = vshll.u32 %v1095, 16
      %v1114 = vor.u32 %v1111, %v1112
      %v1115 = vrot.slane %v1111, 4
      %v1117 = vshrl.u32 %v1096, 16
      %v1119 = vrot.slane %v1117, 7
      %v1120 = vshll.u32 %v1096, 16
      %v1122 = vor.u32 %v1119, %v1120
      %v1123 = vrot.slane %v1119, 4
      %v1125 = vshrl.u32 %v1097, 16
      %v1127 = vrot.slane %v1125, 7
      %v1128 = vshll.u32 %v1097, 16
      %v1130 = vor.u32 %v1127, %v1128
      %v1131 = vrot.slane %v1127, 4
      %v1133 = vshrl.u32 %v1098, 16
      %v1135 = vrot.slane %v1133, 7
      %v1136 = vshll.u32 %v1098, 16
      %v1138 = vor.u32 %v1135, %v1136
      %v1139 = vrot.slane %v1135, 4
      %v1141 = vshrl.u32 %v1099, 16
      %v1143 = vrot.slane %v1141, 7
      %v1144 = vshll.u32 %v1099, 16
      %v1146 = vor.u32 %v1143, %v1144
      %v1147 = vrot.slane %v1143, 4
      %vm1160 = vcmask 60416
      %vm1161 = vmand %vm1160, %vm1056
      %v1162 = vld [vmem:[#allocation2] sm:$0xf]
      %v1163 = vsel %vm1161, %v1106, %v1162
      %1164 = vst [vmem:[#allocation2] sm:$0xf] %v1163
      %v1165 = vld [vmem:[#allocation2 + $0x4] sm:$0x1]
      %v1166 = vsel %vm1037, %v1107, %v1165
      %1167 = vst [vmem:[#allocation2 + $0x4] sm:$0x1] %v1166
      %v1168 = vld [vmem:[#allocation2 + $0x8] sm:$0xf]
      %v1169 = vsel %vm1161, %v1114, %v1168
      %1170 = vst [vmem:[#allocation2 + $0x8] sm:$0xf] %v1169
      %v1171 = vld [vmem:[#allocation2 + $0xc] sm:$0x1]
      %v1172 = vsel %vm1037, %v1115, %v1171
      %1173 = vst [vmem:[#allocation2 + $0xc] sm:$0x1] %v1172
      %v1174 = vld [vmem:[#allocation2 + $0x10] sm:$0xf]
      %v1175 = vsel %vm1161, %v1122, %v1174
      %1176 = vst [vmem:[#allocation2 + $0x10] sm:$0xf] %v1175
      %v1177 = vld [vmem:[#allocation2 + $0x14] sm:$0x1]
      %v1178 = vsel %vm1037, %v1123, %v1177
      %1179 = vst [vmem:[#allocation2 + $0x14] sm:$0x1] %v1178
      %v1180 = vld [vmem:[#allocation2 + $0x18] sm:$0xf]
      %v1181 = vsel %vm1161, %v1130, %v1180
      %1182 = vst [vmem:[#allocation2 + $0x18] sm:$0xf] %v1181
      %v1183 = vld [vmem:[#allocation2 + $0x1c] sm:$0x1]
      %v1184 = vsel %vm1037, %v1131, %v1183
      %1185 = vst [vmem:[#allocation2 + $0x1c] sm:$0x1] %v1184
      %v1186 = vld [vmem:[#allocation2 + $0x20] sm:$0xf]
      %v1187 = vsel %vm1161, %v1138, %v1186
      %1188 = vst [vmem:[#allocation2 + $0x20] sm:$0xf] %v1187
      %v1189 = vld [vmem:[#allocation2 + $0x24] sm:$0x1]
      %v1190 = vsel %vm1037, %v1139, %v1189
      %1191 = vst [vmem:[#allocation2 + $0x24] sm:$0x1] %v1190
      %v1192 = vld [vmem:[#allocation2 + $0x28] sm:$0xf]
      %v1193 = vsel %vm1161, %v1146, %v1192
      %1194 = vst [vmem:[#allocation2 + $0x28] sm:$0xf] %v1193
      %v1195 = vld [vmem:[#allocation2 + $0x2c] sm:$0x1]
      %v1196 = vsel %vm1037, %v1147, %v1195
      %1197 = vst [vmem:[#allocation2 + $0x2c] sm:$0x1] %v1196
      %v1198 = vld [vmem:[#allocation2] sm:$0xf]
      %v1199 = vld [vmem:[#allocation2 + $0x8] sm:$0xf]
      %v1200 = vld [vmem:[#allocation2 + $0x10] sm:$0xf]
      %v1201 = vld [vmem:[#allocation2 + $0x18] sm:$0xf]
      %v1202 = vld [vmem:[#allocation2 + $0x4] sm:$0x1]
      %v1203 = vld [vmem:[#allocation2 + $0xc] sm:$0x1]
      %v1204 = vld [vmem:[#allocation2 + $0x14] sm:$0x1]
      %v1205 = vld [vmem:[#allocation2 + $0x1c] sm:$0x1]
      %v1207 = vshrl.u32 %v1198, 16
      %v1209 = vrot.slane %v1207, 4
      %v1210 = vshll.u32 %v1198, 16
      %v1212 = vrot.slane %v1210, 5
      %v1213 = vor.u32 %v1209, %v1212
      %v1214 = vrot.slane %v1213, 4
      %v1216 = vshll.u32 %v1202, 16
      %v1218 = vrot.slane %v1216, 5
      %v1219 = vsel %vm335, %v1214, %v1218
      %v1221 = vshrl.u32 %v1199, 16
      %v1223 = vrot.slane %v1221, 4
      %v1224 = vshll.u32 %v1199, 16
      %v1226 = vrot.slane %v1224, 5
      %v1227 = vor.u32 %v1223, %v1226
      %v1228 = vrot.slane %v1227, 4
      %v1230 = vshll.u32 %v1203, 16
      %v1232 = vrot.slane %v1230, 5
      %v1233 = vsel %vm335, %v1228, %v1232
      %v1235 = vshrl.u32 %v1200, 16
      %v1237 = vrot.slane %v1235, 4
      %v1238 = vshll.u32 %v1200, 16
      %v1240 = vrot.slane %v1238, 5
      %v1241 = vor.u32 %v1237, %v1240
      %v1242 = vrot.slane %v1241, 4
      %v1244 = vshll.u32 %v1204, 16
      %v1246 = vrot.slane %v1244, 5
      %v1247 = vsel %vm335, %v1242, %v1246
      %v1249 = vshrl.u32 %v1201, 16
      %v1251 = vrot.slane %v1249, 4
      %v1252 = vshll.u32 %v1201, 16
      %v1254 = vrot.slane %v1252, 5
      %v1255 = vor.u32 %v1251, %v1254
      %v1256 = vrot.slane %v1255, 4
      %v1258 = vshll.u32 %v1205, 16
      %v1260 = vrot.slane %v1258, 5
      %v1261 = vsel %vm335, %v1256, %v1260
      %v1262 = vld [vmem:[#allocation2] sm:$0xe]
      %v1263 = vld [vmem:[#allocation2 + $0x8] sm:$0xe]
      %v1264 = vld [vmem:[#allocation2 + $0x10] sm:$0xe]
      %v1265 = vld [vmem:[#allocation2 + $0x18] sm:$0xe]
      %vm1274 = vcmask 1042432
      %vm1275 = vcmask 1046532
      %vm1276 = vmor %vm1274, %vm1275
      %v1277 = vrot.slane %v1262, 5
      %v1278 = vrot.slane %v1277, 4
      %v1279 = vrot.slane %v1202, 5
      %v1280 = vsel %vm1276, %v1278, %v1279
      %v1281 = vrot.slane %v1263, 5
      %v1282 = vrot.slane %v1281, 4
      %v1283 = vrot.slane %v1203, 5
      %v1284 = vsel %vm1276, %v1282, %v1283
      %v1285 = vrot.slane %v1264, 5
      %v1286 = vrot.slane %v1285, 4
      %v1287 = vrot.slane %v1204, 5
      %v1288 = vsel %vm1276, %v1286, %v1287
      %v1289 = vrot.slane %v1265, 5
      %v1290 = vrot.slane %v1289, 4
      %v1291 = vrot.slane %v1205, 5
      %v1292 = vsel %vm1276, %v1290, %v1291
      %s1293 = scalar_lea.vmem [#allocation2], 8
      %v1294 = vld [vmem:[%s1293] sm:$0xf]
      %v1295 = vld [vmem:[%s1293 + $0x8] sm:$0xf]
      %v1296 = vld [vmem:[%s1293 + $0x10] sm:$0xf]
      %v1297 = vld [vmem:[%s1293 + $0x18] sm:$0xf]
      %v1298 = vld [vmem:[%s1293 + $0x4] sm:$0x1]
      %v1299 = vld [vmem:[%s1293 + $0xc] sm:$0x1]
      %v1300 = vld [vmem:[%s1293 + $0x14] sm:$0x1]
      %v1301 = vld [vmem:[%s1293 + $0x1c] sm:$0x1]
      %v1303 = vshrl.u32 %v1294, 16
      %v1305 = vrot.slane %v1303, 4
      %v1306 = vshll.u32 %v1294, 16
      %v1308 = vrot.slane %v1306, 5
      %v1309 = vor.u32 %v1305, %v1308
      %v1310 = vrot.slane %v1309, 4
      %v1312 = vshll.u32 %v1298, 16
      %v1314 = vrot.slane %v1312, 5
      %v1315 = vsel %vm335, %v1310, %v1314
      %v1317 = vshrl.u32 %v1295, 16
      %v1319 = vrot.slane %v1317, 4
      %v1320 = vshll.u32 %v1295, 16
      %v1322 = vrot.slane %v1320, 5
      %v1323 = vor.u32 %v1319, %v1322
      %v1324 = vrot.slane %v1323, 4
      %v1326 = vshll.u32 %v1299, 16
      %v1328 = vrot.slane %v1326, 5
      %v1329 = vsel %vm335, %v1324, %v1328
      %v1331 = vshrl.u32 %v1296, 16
      %v1333 = vrot.slane %v1331, 4
      %v1334 = vshll.u32 %v1296, 16
      %v1336 = vrot.slane %v1334, 5
      %v1337 = vor.u32 %v1333, %v1336
      %v1338 = vrot.slane %v1337, 4
      %v1340 = vshll.u32 %v1300, 16
      %v1342 = vrot.slane %v1340, 5
      %v1343 = vsel %vm335, %v1338, %v1342
      %v1345 = vshrl.u32 %v1297, 16
      %v1347 = vrot.slane %v1345, 4
      %v1348 = vshll.u32 %v1297, 16
      %v1350 = vrot.slane %v1348, 5
      %v1351 = vor.u32 %v1347, %v1350
      %v1352 = vrot.slane %v1351, 4
      %v1354 = vshll.u32 %v1301, 16
      %v1356 = vrot.slane %v1354, 5
      %v1357 = vsel %vm335, %v1352, %v1356
      %v1358 = vld [vmem:[%s1293] sm:$0xe]
      %v1359 = vld [vmem:[%s1293 + $0x8] sm:$0xe]
      %v1360 = vld [vmem:[%s1293 + $0x10] sm:$0xe]
      %v1361 = vld [vmem:[%s1293 + $0x18] sm:$0xe]
      %v1370 = vrot.slane %v1358, 5
      %v1371 = vrot.slane %v1370, 4
      %v1372 = vrot.slane %v1298, 5
      %v1373 = vsel %vm1276, %v1371, %v1372
      %v1374 = vrot.slane %v1359, 5
      %v1375 = vrot.slane %v1374, 4
      %v1376 = vrot.slane %v1299, 5
      %v1377 = vsel %vm1276, %v1375, %v1376
      %v1378 = vrot.slane %v1360, 5
      %v1379 = vrot.slane %v1378, 4
      %v1380 = vrot.slane %v1300, 5
      %v1381 = vsel %vm1276, %v1379, %v1380
      %v1382 = vrot.slane %v1361, 5
      %v1383 = vrot.slane %v1382, 4
      %v1384 = vrot.slane %v1301, 5
      %v1385 = vsel %vm1276, %v1383, %v1384
      %s1386 = scalar_lea.vmem [#allocation2], 16
      %v1387 = vld [vmem:[%s1386] sm:$0xf]
      %v1388 = vld [vmem:[%s1386 + $0x8] sm:$0xf]
      %v1389 = vld [vmem:[%s1386 + $0x10] sm:$0xf]
      %v1390 = vld [vmem:[%s1386 + $0x18] sm:$0xf]
      %v1391 = vld [vmem:[%s1386 + $0x4] sm:$0x1]
      %v1392 = vld [vmem:[%s1386 + $0xc] sm:$0x1]
      %v1393 = vld [vmem:[%s1386 + $0x14] sm:$0x1]
      %v1394 = vld [vmem:[%s1386 + $0x1c] sm:$0x1]
      %v1396 = vshrl.u32 %v1387, 16
      %v1398 = vrot.slane %v1396, 4
      %v1399 = vshll.u32 %v1387, 16
      %v1401 = vrot.slane %v1399, 5
      %v1402 = vor.u32 %v1398, %v1401
      %v1403 = vrot.slane %v1402, 4
      %v1405 = vshll.u32 %v1391, 16
      %v1407 = vrot.slane %v1405, 5
      %v1408 = vsel %vm335, %v1403, %v1407
      %v1410 = vshrl.u32 %v1388, 16
      %v1412 = vrot.slane %v1410, 4
      %v1413 = vshll.u32 %v1388, 16
      %v1415 = vrot.slane %v1413, 5
      %v1416 = vor.u32 %v1412, %v1415
      %v1417 = vrot.slane %v1416, 4
      %v1419 = vshll.u32 %v1392, 16
      %v1421 = vrot.slane %v1419, 5
      %v1422 = vsel %vm335, %v1417, %v1421
      %v1424 = vshrl.u32 %v1389, 16
      %v1426 = vrot.slane %v1424, 4
      %v1427 = vshll.u32 %v1389, 16
      %v1429 = vrot.slane %v1427, 5
      %v1430 = vor.u32 %v1426, %v1429
      %v1431 = vrot.slane %v1430, 4
      %v1433 = vshll.u32 %v1393, 16
      %v1435 = vrot.slane %v1433, 5
      %v1436 = vsel %vm335, %v1431, %v1435
      %v1438 = vshrl.u32 %v1390, 16
      %v1440 = vrot.slane %v1438, 4
      %v1441 = vshll.u32 %v1390, 16
      %v1443 = vrot.slane %v1441, 5
      %v1444 = vor.u32 %v1440, %v1443
      %v1445 = vrot.slane %v1444, 4
      %v1447 = vshll.u32 %v1394, 16
      %v1449 = vrot.slane %v1447, 5
      %v1450 = vsel %vm335, %v1445, %v1449
      %v1451 = vld [vmem:[%s1386] sm:$0xe]
      %v1452 = vld [vmem:[%s1386 + $0x8] sm:$0xe]
      %v1453 = vld [vmem:[%s1386 + $0x10] sm:$0xe]
      %v1454 = vld [vmem:[%s1386 + $0x18] sm:$0xe]
      %v1463 = vrot.slane %v1451, 5
      %v1464 = vrot.slane %v1463, 4
      %v1465 = vrot.slane %v1391, 5
      %v1466 = vsel %vm1276, %v1464, %v1465
      %v1467 = vrot.slane %v1452, 5
      %v1468 = vrot.slane %v1467, 4
      %v1469 = vrot.slane %v1392, 5
      %v1470 = vsel %vm1276, %v1468, %v1469
      %v1471 = vrot.slane %v1453, 5
      %v1472 = vrot.slane %v1471, 4
      %v1473 = vrot.slane %v1393, 5
      %v1474 = vsel %vm1276, %v1472, %v1473
      %v1475 = vrot.slane %v1454, 5
      %v1476 = vrot.slane %v1475, 4
      %v1477 = vrot.slane %v1394, 5
      %v1478 = vsel %vm1276, %v1476, %v1477
      %v1483 = vunpack.c.l.b16 %v1198
      %v1484 = vunpack.c.l.b16 %v1199
      %v1485 = vunpack.c.l.b16 %v1200
      %v1486 = vunpack.c.l.b16 %v1201
      %v1487 = vpack.c.b16 %v1484, %v1483
      %v1488 = vpack.c.b16 %v1486, %v1485
      %v1489 = vunpack.c.l.b16 %v1219
      %v1490 = vunpack.c.l.b16 %v1233
      %v1491 = vunpack.c.l.b16 %v1247
      %v1492 = vunpack.c.l.b16 %v1261
      %v1493 = vpack.c.b16 %v1490, %v1489
      %v1494 = vpack.c.b16 %v1492, %v1491
      %1495 = vrot.lane.b32.xlu0 %v1493, 8
      %v1496 = vpop.permute.xlu0 %1495
      %1497 = vrot.lane.b32.xlu0 %v1494, 8
      %v1498 = vpop.permute.xlu0 %1497
      %v1499 = vunpack.c.l.b16 %v1280
      %v1500 = vunpack.c.l.b16 %v1284
      %v1501 = vunpack.c.l.b16 %v1288
      %v1502 = vunpack.c.l.b16 %v1292
      %v1503 = vpack.c.b16 %v1500, %v1499
      %v1504 = vpack.c.b16 %v1502, %v1501
      %1505 = vrot.lane.b32.xlu0 %v1503, 16
      %v1506 = vpop.permute.xlu0 %1505
      %1507 = vrot.lane.b32.xlu0 %v1504, 16
      %v1508 = vpop.permute.xlu0 %1507
      %v1513 = vunpack.c.l.b16 %v1294
      %v1514 = vunpack.c.l.b16 %v1295
      %v1515 = vunpack.c.l.b16 %v1296
      %v1516 = vunpack.c.l.b16 %v1297
      %v1517 = vpack.c.b16 %v1514, %v1513
      %v1518 = vpack.c.b16 %v1516, %v1515
      %1519 = vrot.lane.b32.xlu0 %v1517, 24
      %v1520 = vpop.permute.xlu0 %1519
      %1521 = vrot.lane.b32.xlu0 %v1518, 24
      %v1522 = vpop.permute.xlu0 %1521
      %v1523 = vunpack.c.l.b16 %v1315
      %v1524 = vunpack.c.l.b16 %v1329
      %v1525 = vunpack.c.l.b16 %v1343
      %v1526 = vunpack.c.l.b16 %v1357
      %v1527 = vpack.c.b16 %v1524, %v1523
      %v1528 = vpack.c.b16 %v1526, %v1525
      %1529 = vrot.lane.b32.xlu0 %v1527, 32
      %v1530 = vpop.permute.xlu0 %1529
      %1531 = vrot.lane.b32.xlu0 %v1528, 32
      %v1532 = vpop.permute.xlu0 %1531
      %v1533 = vunpack.c.l.b16 %v1373
      %v1534 = vunpack.c.l.b16 %v1377
      %v1535 = vunpack.c.l.b16 %v1381
      %v1536 = vunpack.c.l.b16 %v1385
      %v1537 = vpack.c.b16 %v1534, %v1533
      %v1538 = vpack.c.b16 %v1536, %v1535
      %1539 = vrot.lane.b32.xlu0 %v1537, 40
      %v1540 = vpop.permute.xlu0 %1539
      %1541 = vrot.lane.b32.xlu0 %v1538, 40
      %v1542 = vpop.permute.xlu0 %1541
      %v1547 = vunpack.c.l.b16 %v1387
      %v1548 = vunpack.c.l.b16 %v1388
      %v1549 = vunpack.c.l.b16 %v1389
      %v1550 = vunpack.c.l.b16 %v1390
      %v1551 = vpack.c.b16 %v1548, %v1547
      %v1552 = vpack.c.b16 %v1550, %v1549
      %1553 = vrot.lane.b32.xlu0 %v1551, 48
      %v1554 = vpop.permute.xlu0 %1553
      %1555 = vrot.lane.b32.xlu0 %v1552, 48
      %v1556 = vpop.permute.xlu0 %1555
      %v1557 = vunpack.c.l.b16 %v1408
      %v1558 = vunpack.c.l.b16 %v1422
      %v1559 = vunpack.c.l.b16 %v1436
      %v1560 = vunpack.c.l.b16 %v1450
      %v1561 = vpack.c.b16 %v1558, %v1557
      %v1562 = vpack.c.b16 %v1560, %v1559
      %1563 = vrot.lane.b32.xlu0 %v1561, 56
      %v1564 = vpop.permute.xlu0 %1563
      %1565 = vrot.lane.b32.xlu0 %v1562, 56
      %v1566 = vpop.permute.xlu0 %1565
      %v1567 = vunpack.c.l.b16 %v1466
      %v1568 = vunpack.c.l.b16 %v1470
      %v1569 = vunpack.c.l.b16 %v1474
      %v1570 = vunpack.c.l.b16 %v1478
      %v1571 = vpack.c.b16 %v1568, %v1567
      %v1572 = vpack.c.b16 %v1570, %v1569
      %1573 = vrot.lane.b32.xlu0 %v1571, 64
      %v1574 = vpop.permute.xlu0 %1573
      %1575 = vrot.lane.b32.xlu0 %v1572, 64
      %v1576 = vpop.permute.xlu0 %1575
      %v1579 = vsel %vm812, %v1487, %v1496
      %v1582 = vsel %vm812, %v1488, %v1498
      %v1584 = vsel %vm826, %v1579, %v1506
      %v1586 = vsel %vm826, %v1582, %v1508
      %v1588 = vsel %vm840, %v1584, %v1520
      %v1590 = vsel %vm840, %v1586, %v1522
      %v1592 = vsel %vm854, %v1588, %v1530
      %v1594 = vsel %vm854, %v1590, %v1532
      %vm1595 = vcmask 326656
      %v1597 = vsel %vm1595, %v1592, %v1540
      %v1599 = vsel %vm1595, %v1594, %v1542
      %vm1600 = vcmask 392192
      %v1602 = vsel %vm1600, %v1597, %v1554
      %v1604 = vsel %vm1600, %v1599, %v1556
      %vm1605 = vcmask 457728
      %v1607 = vsel %vm1605, %v1602, %v1564
      %v1609 = vsel %vm1605, %v1604, %v1566
      %vm1610 = vcmask 523264
      %v1612 = vsel %vm1610, %v1607, %v1574
      %v1614 = vsel %vm1610, %v1609, %v1576
      %v1615 = vld [vmem:[%s3] sm:$0xf]
      %v1616 = vld [vmem:[%s3 + $0x4] sm:$0xf]
      %v1617 = vld [vmem:[%s3 + $0x8] sm:$0xf]
      %v1618 = vld [vmem:[%s3 + $0xc] sm:$0xf]
      %v1619 = vld [vmem:[%s3 + $0x10] sm:$0xf]
      %v1620 = vld [vmem:[%s3 + $0x14] sm:$0xf]
      %v1621 = vld [vmem:[%s3 + $0x18] sm:$0xf]
      %v1622 = vld [vmem:[%s3 + $0x1c] sm:$0xf]
      %v1623 = vld [vmem:[%s3 + $0x20] sm:$0xf]
      %v1624 = vld [vmem:[%s4] sm:$0x1]
      %v1626 = vlaneseq
      %v1627 = vshrl.u32 %v1626, 7
      %v1628 = vsub.s32 0, %v1627
      %v1629 = vrot.slane %v1624, %v1628
      %v1640 = vunpack.c.l.b16 %v1615
      %v1641 = vunpack.c.l.b16 %v1616
      %v1642 = vunpack.c.l.b16 %v1617
      %v1643 = vunpack.c.l.b16 %v1618
      %v1644 = vunpack.c.l.b16 %v1619
      %v1645 = vunpack.c.l.b16 %v1620
      %v1646 = vunpack.c.l.b16 %v1621
      %v1647 = vunpack.c.l.b16 %v1622
      %v1648 = vunpack.c.l.b16 %v1623
      %v1649 = vpack.c.b16 %v1641, %v1640
      %v1650 = vpack.c.b16 %v1643, %v1642
      %v1651 = vpack.c.b16 %v1645, %v1644
      %v1652 = vpack.c.b16 %v1647, %v1646
      %v1653 = vpack.c.b16 %v1648, %v1648
      %vm1658 = vcmask 588800
      %v1659 = vsel %vm1658, %v1612, 0
      %v1661 = vsel %vm1658, %v1614, 0
      %vm1663 = vcmask 1043456
      %v1665 = vsel %vm1663, %v1653, 0
      %1667 = vmatprep.subr.bf16.mxu0 0
      %1668 = vmatpush1.bf16.msra.mxu0 %v1649
      %1669 = vmatprep.subr.bf16.mxu0 0
      %1670 = vmatpush1.bf16.msra.mxu0 %v1650
      %1671 = vmatprep.subr.bf16.mxu0 0
      %1672 = vmatpush1.bf16.msra.mxu0 %v1651
      %1673 = vmatprep.subr.bf16.mxu0 0
      %1674 = vmatpush1.bf16.msra.mxu0 %v1652
      %1675 = vmatprep.subr.bf16.mxu0 0
      %1676 = vmatpush1.bf16.msra.mxu0 %v1665
      %1677 = vmatprep.subr.bf16.mxu0 0
      %1678 = vmatpush1.bf16.msra.mxu0 0
      %1679 = vmatprep.subr.bf16.mxu0 0
      %1680 = vmatpush1.bf16.msra.mxu0 0
      %1681 = vmatprep.subr.bf16.mxu0 0
      %1682 = vmatpush1.bf16.msra.mxu0 0
      %1683 = vmatprep.subr.bf16.mxu0 0
      %1684 = vmatpush1.bf16.msra.mxu0 0
      %1685 = vmatprep.subr.bf16.mxu0 0
      %1686 = vmatpush1.bf16.msra.mxu0 0
      %1687 = vmatprep.subr.bf16.mxu0 0
      %1688 = vmatpush1.bf16.msra.mxu0 0
      %1689 = vmatprep.subr.bf16.mxu0 0
      %1690 = vmatpush1.bf16.msra.mxu0 0
      %1691 = vmatprep.subr.bf16.mxu0 0
      %1692 = vmatpush1.bf16.msra.mxu0 0
      %1693 = vmatprep.subr.bf16.mxu0 0
      %1694 = vmatpush1.bf16.msra.mxu0 0
      %1695 = vmatprep.subr.bf16.mxu0 0
      %1696 = vmatpush1.bf16.msra.mxu0 0
      %1697 = vmatprep.subr.bf16.mxu0 0
      %1698 = vmatpush1.bf16.msra.mxu0 0
      %1699 = vmatprep.mubr.bf16.mxu0 0
      %1700 = vmatmul.mubr.bf16.gmra.mrb[0].mxu0 %v1659
      %v1701 = vpop.f32.mrb[0].mxu0
      %v1702 = vadd.f32 %v1629, %v1701
      %v1703 = vpop.f32.mrb[0].mxu0
      %v1704 = vpop.f32.mrb[0].mxu0
      %v1705 = vadd.f32 %v1629, %v1704
      %v1706 = vpop.f32.mrb[0].mxu0
      %1707 = vmatprep.mubr.bf16.mxu0 0
      %1708 = vmatmul.mubr.bf16.gmra.mrb[0].mxu0 %v1661
      %v1709 = vpop.f32.mrb[0].mxu0
      %v1710 = vadd.f32 %v1629, %v1709
      %v1711 = vpop.f32.mrb[0].mxu0
      %v1712 = vpop.f32.mrb[0].mxu0
      %v1713 = vadd.f32 %v1629, %v1712
      %v1714 = vpop.f32.mrb[0].mxu0
      %1715 = vdwg.mxu0
      %s1716 = sadd.s32 %s529, 66
      %s1717 = smul.addr %s1716, 4
      %s1718 = scalar_lea.vmem %s295, %s1717
      %v1719 = vld [vmem:[%s1718] sm:$0xf]
      %v1720 = vld [vmem:[%s1718 + $0x8] sm:$0xf]
      %v1721 = vld [vmem:[%s1718 + $0x10] sm:$0xf]
      %v1722 = vld [vmem:[%s1718 + $0x18] sm:$0xf]
      %v1723 = vld [vmem:[%s5] sm:$0x3]
      %v1724 = vld [vmem:[%s6] sm:$0x1]
      %v1726 = vlaneseq
      %v1727 = vshrl.u32 %v1726, 7
      %v1728 = vsub.s32 0, %v1727
      %v1729 = vrot.slane %v1724, %v1728
      %v1735 = vunpack.c.l.b16 %v1719
      %v1736 = vunpack.c.l.b16 %v1720
      %v1737 = vunpack.c.l.b16 %v1721
      %v1738 = vunpack.c.l.b16 %v1722
      %v1739 = vpack.c.b16 %v1736, %v1735
      %v1740 = vpack.c.b16 %v1738, %v1737
      %v1742 = vsel %vm802, %v1739, 0
      %v1745 = vsel %vm802, %v1740, 0
      %v1748 = vsel %vm895, %v1723, 0
      %1750 = vmatprep.subr.bf16.mxu0 0
      %1751 = vmatpush1.bf16.msra.mxu0 %v1748
      %1752 = vmatprep.subr.bf16.mxu0 0
      %1753 = vmatpush1.bf16.msra.mxu0 0
      %1754 = vmatprep.subr.bf16.mxu0 0
      %1755 = vmatpush1.bf16.msra.mxu0 0
      %1756 = vmatprep.subr.bf16.mxu0 0
      %1757 = vmatpush1.bf16.msra.mxu0 0
      %1758 = vmatprep.subr.bf16.mxu0 0
      %1759 = vmatpush1.bf16.msra.mxu0 0
      %1760 = vmatprep.subr.bf16.mxu0 0
      %1761 = vmatpush1.bf16.msra.mxu0 0
      %1762 = vmatprep.subr.bf16.mxu0 0
      %1763 = vmatpush1.bf16.msra.mxu0 0
      %1764 = vmatprep.subr.bf16.mxu0 0
      %1765 = vmatpush1.bf16.msra.mxu0 0
      %1766 = vmatprep.subr.bf16.mxu0 0
      %1767 = vmatpush1.bf16.msra.mxu0 0
      %1768 = vmatprep.subr.bf16.mxu0 0
      %1769 = vmatpush1.bf16.msra.mxu0 0
      %1770 = vmatprep.subr.bf16.mxu0 0
      %1771 = vmatpush1.bf16.msra.mxu0 0
      %1772 = vmatprep.subr.bf16.mxu0 0
      %1773 = vmatpush1.bf16.msra.mxu0 0
      %1774 = vmatprep.subr.bf16.mxu0 0
      %1775 = vmatpush1.bf16.msra.mxu0 0
      %1776 = vmatprep.subr.bf16.mxu0 0
      %1777 = vmatpush1.bf16.msra.mxu0 0
      %1778 = vmatprep.subr.bf16.mxu0 0
      %1779 = vmatpush1.bf16.msra.mxu0 0
      %1780 = vmatprep.subr.bf16.mxu0 0
      %1781 = vmatpush1.bf16.msra.mxu0 0
      %1782 = vmatprep.mubr.bf16.mxu0 0
      %1783 = vmatmul.mubr.bf16.gmra.mrb[0].mxu0 %v1742
      %v1784 = vpop.f32.mrb[0].mxu0
      %v1785 = vadd.f32 %v1729, %v1784
      %v1786 = vpop.f32.mrb[0].mxu0
      %v1787 = vpop.f32.mrb[0].mxu0
      %v1788 = vadd.f32 %v1729, %v1787
      %v1789 = vpop.f32.mrb[0].mxu0
      %1790 = vmatprep.mubr.bf16.mxu0 0
      %1791 = vmatmul.mubr.bf16.gmra.mrb[0].mxu0 %v1745
      %v1792 = vpop.f32.mrb[0].mxu0
      %v1793 = vadd.f32 %v1729, %v1792
      %v1794 = vpop.f32.mrb[0].mxu0
      %v1795 = vpop.f32.mrb[0].mxu0
      %v1796 = vadd.f32 %v1729, %v1795
      %v1797 = vpop.f32.mrb[0].mxu0
      %1798 = vdwg.mxu0
      %v1799 = vadd.f32 %v1702, %v1785
      %v1800 = vadd.f32 %v1705, %v1788
      %v1801 = vadd.f32 %v1710, %v1793
      %v1802 = vadd.f32 %v1713, %v1796
      %v1803 = vsub.f32 0.0, %v1799
      %v1804 = vsub.f32 0.0, %v1800
      %v1805 = vsub.f32 0.0, %v1801
      %v1806 = vsub.f32 0.0, %v1802
      %v1807 = vmul.f32 %v1803, 1.442695
      %v1808 = vpow.pop %v1807
      %v1809 = vmul.f32 %v1804, 1.442695
      %v1810 = vpow.pop %v1809
      %v1811 = vmul.f32 %v1805, 1.442695
      %v1812 = vpow.pop %v1811
      %v1813 = vmul.f32 %v1806, 1.442695
      %v1814 = vpow.pop %v1813
      %v1815 = vadd.f32 %v1808, 1.0
      %v1816 = vadd.f32 %v1810, 1.0
      %v1817 = vadd.f32 %v1812, 1.0
      %v1818 = vadd.f32 %v1814, 1.0
      %v1819 = vrcp.pop %v1815
      %v1820 = vrcp.pop %v1816
      %v1821 = vrcp.pop %v1817
      %v1822 = vrcp.pop %v1818
      %v1823 = vmul.f32 %v1799, %v1819
      %v1824 = vmul.f32 %v1800, %v1820
      %v1825 = vmul.f32 %v1801, %v1821
      %v1826 = vmul.f32 %v1802, %v1822
      %v1827 = vpack.c.bf16 %v1824, %v1823
      %v1828 = vpack.c.bf16 %v1826, %v1825
      %v1831 = vunpack.c.l.b16 %v1827
      %v1832 = vunpack.c.h.b16 %v1827
      %v1833 = vunpack.c.l.b16 %v1828
      %v1834 = vunpack.c.h.b16 %v1828
      %v1835 = vpack.c.b16 %v1831, %v1831
      %v1836 = vpack.c.b16 %v1832, %v1832
      %v1837 = vpack.c.b16 %v1833, %v1833
      %v1838 = vpack.c.b16 %v1834, %v1834
      %vm1843 = vcmask 60416
      %1844 = vst.msk [vmem:[%s305] sm:$0xf] %vm1843, %v1835
      %1845 = vst.msk [vmem:[%s305 + $0x4] sm:$0xf] %vm1843, %v1836
      %1846 = vst.msk [vmem:[%s305 + $0x8] sm:$0xf] %vm1843, %v1837
      %1847 = vst.msk [vmem:[%s305 + $0xc] sm:$0xf] %vm1843, %v1838
      %s1848 = smul.u32 4, %s23
      %p1849 = scmp.lt.s32.totalorder %s22, 1
      %s1850 = scalar_select %p1849, %s22, 1
      %p1851 = scmp.lt.s32.totalorder %s1848, 7
      %s1852 = scalar_select %p1851, %s1848, 7
      %s1853 = smul.addr %s1850, 8
      %s1854 = sadd.s32 %s1852, %s1853
      %s1855 = smul.addr %s1854, 4
      %s1856 = scalar_lea.vmem %s7, %s1855
      // Predicated region
      $region49: #{tpu_custom_call.1} parent=47 // pred_check
        %p1857 = pneg %p202
      $region50: #{tpu_custom_call.1} parent=47 // pred_check_branch
        %1859 = sbr.rel (%p1857) target = $region52
      $region51: #{tpu_custom_call.1} parent=47 // pred_region
        %s1860 = smul.u32 4, %s23
      $region52: #{tpu_custom_call.1} parent=47 // pred_fallthru
        _
    $region48: #{tpu_custom_call.1} parent=5 // pred_fallthru
      _
    %p1861 = scmp.le.s32.totalorder 2, %s13
    // Predicated region
    $region53: #{tpu_custom_call.1} parent=5 // pred_check
      %p1862 = pneg %p1861
    $region54: #{tpu_custom_call.1} parent=5 // pred_check_branch
      %1864 = sbr.rel (%p1862) target = $region56
    $region55: #{tpu_custom_call.1} parent=5 // pred_region
      %s1865 = ssub.s32 %s13, 2
      // Predicated region
      $region57: #{tpu_custom_call.1} parent=55 // pred_check
        %p1866 = pneg %p208
      $region58: #{tpu_custom_call.1} parent=55 // pred_check_branch
        %1868 = sbr.rel (%p1866) target = $region60
      $region59: #{tpu_custom_call.1} parent=55 // pred_region
        %s1869 = smul.u32 4, %s25
        %p1870 = scmp.lt.s32.totalorder %s24, 1
        %s1871 = scalar_select %p1870, %s24, 1
        %p1872 = scmp.lt.s32.totalorder %s1869, 7
        %s1873 = scalar_select %p1872, %s1869, 7
        %s1874 = smul.addr %s1871, 8
        %s1875 = sadd.s32 %s1873, %s1874
        %s1876 = smul.addr %s1875, 4
        %s1877 = scalar_lea.vmem %s7, %s1876
      $region60: #{tpu_custom_call.1} parent=55 // pred_fallthru
        _
    $region56: #{tpu_custom_call.1} parent=5 // pred_fallthru
      _
  $region6: #{tpu_custom_call.1} parent=0 // loop_footer
    %s17 = sadd.s32 1, %s13
  $region7: #{tpu_custom_call.1} parent=0 // loop_footer_branch
    %12 = sbr.rel target = $region3
  $region8: #{tpu_custom_call.1} parent=0 // loop_exit
    _

</llo_original>
